<compile_context>
chip_gen: v6e
topology: v6e:2x2x1
jax: 0.10.0
libtpu: 0.0.40
codegen_flags: <defaults>
</compile_context>

<pallas_src>
import functools

import jax
import jax.numpy as jnp
from jax.experimental import pallas as pl
from jax.experimental.pallas import tpu as pltpu


# ----------------------------------------------------------------------------
# Pallas kernel: fused (x @ w) + ReLU.  bf16 in / bf16 out, f32 accumulation.
# ----------------------------------------------------------------------------
def _matmul_relu_kernel(x_ref, w_ref, o_ref):
    acc = jnp.dot(x_ref[...], w_ref[...], preferred_element_type=jnp.float32)
    o_ref[...] = jnp.maximum(acc, 0.0).astype(o_ref.dtype)


@functools.lru_cache(maxsize=1)
def _vmem_budget_and_limit():
    """Per-generation VMEM sizing (v5e/v6e: 128 MiB, v7x: 64 MiB per core)."""
    try:
        cap = int(pltpu.get_tpu_info().vmem_capacity_bytes)
    except Exception:  # conservative fallback = smallest generation (v7x)
        cap = 64 * 1024 * 1024
    limit = min(cap * 3 // 4, 96 * 1024 * 1024)    # raised scoped-VMEM limit
    budget = min(cap * 2 // 5, 40 * 1024 * 1024)   # what tile sizing may use
    return int(budget), int(limit)


def _choose_tm(rows, k_fold, n_fold, itemsize, budget_bytes, max_tm=2048):
    """Row-tile size: as large as the double-buffered VMEM budget allows,
    capped at max_tm, leaving >= 2 grid steps when rows allow (v7x has two
    TensorCores), and a multiple of 128 (or the full row count)."""
    w_bytes = 2 * k_fold * n_fold * itemsize        # weight (double-buffered)
    per_row = 2 * (k_fold + n_fold) * itemsize      # dbl-buffered in + out rows
    tm = max((budget_bytes - w_bytes) // per_row, 128)
    tm = min(tm, max_tm)
    if rows >= 256:
        tm = min(tm, -(-rows // 2))                 # keep >= 2 grid steps
    if tm >= rows:
        return int(rows)                            # single full-size block
    tm = max(128, (tm // 128) * 128)
    return int(min(tm, rows))


def _deconv2_relu_flat(x_flat, weight, *, budget_bytes, vmem_limit_bytes):
    """One decoder layer on the flat pixel-major / channel-minor stream.

    x_flat : bf16, length P*Cin (P pixels, Cin channels each, row-major).
    weight : (Cin, Cout, 2, 2) -- PyTorch ConvTranspose2d layout.
    returns bf16, length (4*P)*Cout, same convention: the 4 sub-pixels of each
    input pixel appear consecutively in (ky, kx) order.
    """
    cin, cout, kh, kw = weight.shape
    assert kh == 2 and kw == 2
    total = x_flat.size
    assert total % cin == 0
    n_pix = total // cin
    n_out = 4 * cout

    # Fold F consecutive pixels per matmul row so the output block is
    # lane-dense (>= 128 wide) for the small-channel late layers.
    fold = 1
    while fold * n_out < 128 and n_pix % (2 * fold) == 0:
        fold *= 2
    k_fold, n_fold = fold * cin, fold * n_out
    rows = n_pix // fold

    # Pack weight as (Cin, (ky, kx, Cout)) and replicate block-diagonally
    # across fold groups.  F > 1 only when channel counts are tiny, where the
    # MXU has huge slack, so the extra (zero-block) flops are free.
    w2d = jnp.transpose(weight, (0, 2, 3, 1)).reshape(cin, n_out)
    w2d = w2d.astype(jnp.bfloat16)
    if fold > 1:
        w2d = jnp.kron(jnp.eye(fold, dtype=w2d.dtype), w2d)

    x2d = x_flat.reshape(rows, k_fold)
    tm = _choose_tm(rows, k_fold, n_fold, x2d.dtype.itemsize, budget_bytes)
    grid = (pl.cdiv(rows, tm),)

    y2d = pl.pallas_call(
        _matmul_relu_kernel,
        out_shape=jax.ShapeDtypeStruct((rows, n_fold), jnp.bfloat16),
        grid_spec=pltpu.PrefetchScalarGridSpec(
            num_scalar_prefetch=0,
            grid=grid,
            in_specs=[
                pl.BlockSpec((tm, k_fold), lambda i: (i, 0)),
                # Constant index_map -> weight stays resident; its (double
                # buffered) footprint is accounted for in _choose_tm.
                pl.BlockSpec((k_fold, n_fold), lambda i: (0, 0)),
            ],
            out_specs=pl.BlockSpec((tm, n_fold), lambda i: (i, 0)),
        ),
        compiler_params=pltpu.CompilerParams(
            dimension_semantics=("parallel",),
            vmem_limit_bytes=int(vmem_limit_bytes),
        ),
    )(x2d, w2d)
    return y2d.reshape(-1)


def _final_unshuffle(y_flat, n, h, w, c_last):
    """Compose the 4 deferred pixel shuffles with the NHWC->NCHW transpose.

    y_flat element order: (n, h, w, ky1, kx1, ky2, kx2, ky3, kx3, ky4, kx4, c).
    Done as two rank-8 transposes (TPU-friendly) instead of one rank-12 op.
    TODO(synk): could be folded into the last layer's kernel (channel-major
    stores) to save one pass over the largest tensor.
    """
    # Stage 1: de-interleave the first three (ky, kx) pairs.
    y = y_flat.reshape(n * h * w, 2, 2, 2, 2, 2, 2, 4 * c_last)
    y = jnp.transpose(y, (0, 1, 3, 5, 2, 4, 6, 7))
    # order: (n, h, w, ky1, ky2, ky3, kx1, kx2, kx3, ky4, kx4, c)
    # Stage 2: channels to the front, interleave row/col digits with h / w.
    y = y.reshape(n, h, w, 8, 8, 2, 2, c_last)
    y = jnp.transpose(y, (0, 7, 1, 3, 5, 2, 4, 6))
    # order: (n, c, h, ky1ky2ky3, ky4, w, kx1kx2kx3, kx4)
    return y.reshape(n, c_last, 16 * h, 16 * w)


@jax.jit
def decoder_forward(x_nchw, params):
    """Decoder.forward: 4x [ConvTranspose2d(C, C//2, 2, stride=2) + ReLU]."""
    assert len(params) == 4
    n, _, h, w = x_nchw.shape
    budget, limit = _vmem_budget_and_limit()
    # NCHW -> NHWC -> flat pixel-major / channel-minor stream (bf16).
    x = jnp.transpose(x_nchw, (0, 2, 3, 1)).astype(jnp.bfloat16).reshape(-1)
    for wgt in params:                       # layer1..layer4, no shuffles
        x = _deconv2_relu_flat(x, wgt, budget_bytes=budget,
                               vmem_limit_bytes=limit)
    c_last = params[-1].shape[1]
    out = _final_unshuffle(x, n, h, w, c_last)
    return out.astype(jnp.float32)


def init_decoder_params(c0, key):
    """Deterministic weights for the 4 'deconv2' layers (C -> C//2 each)."""
    params = []
    c = c0
    for _ in range(4):
        key, sub = jax.random.split(key)
        cout = c // 2
        fan_in = c * 2 * 2
        wgt = jax.random.normal(sub, (c, cout, 2, 2), jnp.float32) / jnp.sqrt(fan_in)
        params.append(wgt)
        c = cout
    return params


def _reference_forward(x_nchw, params):
    """Pure-JAX f32 reference (per-layer matmul + pixel shuffle)."""
    x = jnp.transpose(x_nchw, (0, 2, 3, 1))
    for wgt in params:
        n, h, w, cin = x.shape
        cout = wgt.shape[1]
        w2d = jnp.transpose(wgt, (0, 2, 3, 1)).reshape(cin, 4 * cout)
        y = jnp.maximum(x.reshape(-1, cin) @ w2d, 0.0)
        y = y.reshape(n, h, w, 2, 2, cout).transpose(0, 1, 3, 2, 4, 5)
        x = y.reshape(n, 2 * h, 2 * w, cout)
    return jnp.transpose(x, (0, 3, 1, 2))


if __name__ == "__main__":
    key = jax.random.PRNGKey(0)
    k_x, k_w = jax.random.split(key)

    # Small deterministic input: N=2, C=32, H=W=8 (NCHW, matching PyTorch).
    N, C, H, W = 2, 32, 8, 8
    x = jax.random.normal(k_x, (N, C, H, W), jnp.float32)
    params = init_decoder_params(C, k_w)

    out = jax.block_until_ready(decoder_forward(x, params))

    # Shape check: 4 layers of (C -> C/2, HxW -> 2Hx2W).
    assert out.shape == (N, C // 16, H * 16, W * 16), out.shape

    ref = _reference_forward(x, params)
    max_err = float(jnp.max(jnp.abs(out - ref)))
    # bf16 activations/weights with f32 accumulation -> loosened tolerance.
    assert jnp.allclose(out, ref, atol=3e-2, rtol=3e-2), max_err

    print("KERNEL_OK")
</pallas_src>

<mosaic_0001>
module attributes {stable_mosaic.version = 11 : i64} {
  func.func @_matmul_relu_kernel(%arg0: i32, %arg1: memref<64x64xbf16, #tpu.memory_space<vmem>>, %arg2: memref<64x128xbf16, #tpu.memory_space<vmem>>, %arg3: memref<64x128xbf16, #tpu.memory_space<vmem>>) attributes {dimension_semantics = [#tpu.dimension_semantics<parallel>], iteration_bounds = array<i64: 1>, scalar_prefetch = 0 : i64, scratch_operands = 0 : i64, tpu.core_type = #tpu.core_type<tc>, window_params = [{transform_indices = @transform_0, window_bounds = array<i64: 64, 64>}, {pipeline_mode = #tpu.pipeline_mode<synchronous>, transform_indices = @transform_1, window_bounds = array<i64: 64, 128>}, {transform_indices = @transform_2, window_bounds = array<i64: 64, 128>}]} {
    %c0 = arith.constant 0 : index
    %c0_0 = arith.constant 0 : index
    %0 = vector.load %arg1[%c0, %c0_0] : memref<64x64xbf16, #tpu.memory_space<vmem>>, vector<64x64xbf16>
    %c0_1 = arith.constant 0 : index
    %c0_2 = arith.constant 0 : index
    %1 = vector.load %arg2[%c0_1, %c0_2] : memref<64x128xbf16, #tpu.memory_space<vmem>>, vector<64x128xbf16>
    %cst = arith.constant dense<0.000000e+00> : vector<64x128xf32>
    %2 = tpu.matmul %0, %1, %cst {dimension_numbers = #tpu.dot_dimension_numbers<[1], [0], [0], [1], [0, 0, 1, 1], [], []>} : vector<64x64xbf16>, vector<64x128xbf16>, vector<64x128xf32> -> vector<64x128xf32>
    %cst_3 = arith.constant 0.000000e+00 : f32
    %3 = vector.broadcast %cst_3 : f32 to vector<64x128xf32>
    %4 = arith.maximumf %2, %3 : vector<64x128xf32>
    %5 = arith.truncf %4 : vector<64x128xf32> to vector<64x128xbf16>
    %c0_4 = arith.constant 0 : index
    %c0_5 = arith.constant 0 : index
    %6 = vector.load %arg3[%c0_4, %c0_5] : memref<64x128xbf16, #tpu.memory_space<vmem>>, vector<64x128xbf16>
    tpu.vector_store %arg3[%c0_4, %c0_5], %5 {strides = array<i32>} : memref<64x128xbf16, #tpu.memory_space<vmem>>, vector<64x128xbf16>,
    return
  }
  func.func @transform_0(%arg0: i32) -> (i32, i32) {
    %c0_i32 = arith.constant 0 : i32
    %c0_i32_0 = arith.constant 0 : i32
    return %arg0, %c0_i32 : i32, i32
  }
  func.func @transform_1(%arg0: i32) -> (i32, i32) {
    %c0_i32 = arith.constant 0 : i32
    %c0_i32_0 = arith.constant 0 : i32
    %c0_i32_1 = arith.constant 0 : i32
    return %c0_i32, %c0_i32_0 : i32, i32
  }
  func.func @transform_2(%arg0: i32) -> (i32, i32) {
    %c0_i32 = arith.constant 0 : i32
    %c0_i32_0 = arith.constant 0 : i32
    return %arg0, %c0_i32 : i32, i32
  }
}

module attributes {stable_mosaic.version = 11 : i64} {
  func.func @_matmul_relu_kernel(%arg0: i32, %arg1: memref<128x64xbf16, #tpu.memory_space<vmem>>, %arg2: memref<64x128xbf16, #tpu.memory_space<vmem>>, %arg3: memref<128x128xbf16, #tpu.memory_space<vmem>>) attributes {dimension_semantics = [#tpu.dimension_semantics<parallel>], iteration_bounds = array<i64: 1>, scalar_prefetch = 0 : i64, scratch_operands = 0 : i64, tpu.core_type = #tpu.core_type<tc>, window_params = [{transform_indices = @transform_0, window_bounds = array<i64: 128, 64>}, {pipeline_mode = #tpu.pipeline_mode<synchronous>, transform_indices = @transform_1, window_bounds = array<i64: 64, 128>}, {transform_indices = @transform_2, window_bounds = array<i64: 128, 128>}]} {
    %c0 = arith.constant 0 : index
    %c0_0 = arith.constant 0 : index
    %0 = vector.load %arg1[%c0, %c0_0] : memref<128x64xbf16, #tpu.memory_space<vmem>>, vector<128x64xbf16>
    %c0_1 = arith.constant 0 : index
    %c0_2 = arith.constant 0 : index
    %1 = vector.load %arg2[%c0_1, %c0_2] : memref<64x128xbf16, #tpu.memory_space<vmem>>, vector<64x128xbf16>
    %cst = arith.constant dense<0.000000e+00> : vector<128x128xf32>
    %2 = tpu.matmul %0, %1, %cst {dimension_numbers = #tpu.dot_dimension_numbers<[1], [0], [0], [1], [0, 0, 1, 1], [], []>} : vector<128x64xbf16>, vector<64x128xbf16>, vector<128x128xf32> -> vector<128x128xf32>
    %cst_3 = arith.constant 0.000000e+00 : f32
    %3 = vector.broadcast %cst_3 : f32 to vector<128x128xf32>
    %4 = arith.maximumf %2, %3 : vector<128x128xf32>
    %5 = arith.truncf %4 : vector<128x128xf32> to vector<128x128xbf16>
    %c0_4 = arith.constant 0 : index
    %c0_5 = arith.constant 0 : index
    %6 = vector.load %arg3[%c0_4, %c0_5] : memref<128x128xbf16, #tpu.memory_space<vmem>>, vector<128x128xbf16>
    tpu.vector_store %arg3[%c0_4, %c0_5], %5 {strides = array<i32>} : memref<128x128xbf16, #tpu.memory_space<vmem>>, vector<128x128xbf16>,
    return
  }
  func.func @transform_0(%arg0: i32) -> (i32, i32) {
    %c0_i32 = arith.constant 0 : i32
    %c0_i32_0 = arith.constant 0 : i32
    return %arg0, %c0_i32 : i32, i32
  }
  func.func @transform_1(%arg0: i32) -> (i32, i32) {
    %c0_i32 = arith.constant 0 : i32
    %c0_i32_0 = arith.constant 0 : i32
    %c0_i32_1 = arith.constant 0 : i32
    return %c0_i32, %c0_i32_0 : i32, i32
  }
  func.func @transform_2(%arg0: i32) -> (i32, i32) {
    %c0_i32 = arith.constant 0 : i32
    %c0_i32_0 = arith.constant 0 : i32
    return %arg0, %c0_i32 : i32, i32
  }
}

module attributes {stable_mosaic.version = 11 : i64} {
  func.func @_matmul_relu_kernel(%arg0: i32, %arg1: memref<128x64xbf16, #tpu.memory_space<vmem>>, %arg2: memref<64x128xbf16, #tpu.memory_space<vmem>>, %arg3: memref<128x128xbf16, #tpu.memory_space<vmem>>) attributes {dimension_semantics = [#tpu.dimension_semantics<parallel>], iteration_bounds = array<i64: 2>, scalar_prefetch = 0 : i64, scratch_operands = 0 : i64, tpu.core_type = #tpu.core_type<tc>, window_params = [{transform_indices = @transform_0, window_bounds = array<i64: 128, 64>}, {pipeline_mode = #tpu.pipeline_mode<synchronous>, transform_indices = @transform_1, window_bounds = array<i64: 64, 128>}, {transform_indices = @transform_2, window_bounds = array<i64: 128, 128>}]} {
    %c0 = arith.constant 0 : index
    %c0_0 = arith.constant 0 : index
    %0 = vector.load %arg1[%c0, %c0_0] : memref<128x64xbf16, #tpu.memory_space<vmem>>, vector<128x64xbf16>
    %c0_1 = arith.constant 0 : index
    %c0_2 = arith.constant 0 : index
    %1 = vector.load %arg2[%c0_1, %c0_2] : memref<64x128xbf16, #tpu.memory_space<vmem>>, vector<64x128xbf16>
    %cst = arith.constant dense<0.000000e+00> : vector<128x128xf32>
    %2 = tpu.matmul %0, %1, %cst {dimension_numbers = #tpu.dot_dimension_numbers<[1], [0], [0], [1], [0, 0, 1, 1], [], []>} : vector<128x64xbf16>, vector<64x128xbf16>, vector<128x128xf32> -> vector<128x128xf32>
    %cst_3 = arith.constant 0.000000e+00 : f32
    %3 = vector.broadcast %cst_3 : f32 to vector<128x128xf32>
    %4 = arith.maximumf %2, %3 : vector<128x128xf32>
    %5 = arith.truncf %4 : vector<128x128xf32> to vector<128x128xbf16>
    %c0_4 = arith.constant 0 : index
    %c0_5 = arith.constant 0 : index
    %6 = vector.load %arg3[%c0_4, %c0_5] : memref<128x128xbf16, #tpu.memory_space<vmem>>, vector<128x128xbf16>
    tpu.vector_store %arg3[%c0_4, %c0_5], %5 {strides = array<i32>} : memref<128x128xbf16, #tpu.memory_space<vmem>>, vector<128x128xbf16>,
    return
  }
  func.func @transform_0(%arg0: i32) -> (i32, i32) {
    %c0_i32 = arith.constant 0 : i32
    %c0_i32_0 = arith.constant 0 : i32
    return %arg0, %c0_i32 : i32, i32
  }
  func.func @transform_1(%arg0: i32) -> (i32, i32) {
    %c0_i32 = arith.constant 0 : i32
    %c0_i32_0 = arith.constant 0 : i32
    %c0_i32_1 = arith.constant 0 : i32
    return %c0_i32, %c0_i32_0 : i32, i32
  }
  func.func @transform_2(%arg0: i32) -> (i32, i32) {
    %c0_i32 = arith.constant 0 : i32
    %c0_i32_0 = arith.constant 0 : i32
    return %arg0, %c0_i32 : i32, i32
  }
}

module attributes {stable_mosaic.version = 11 : i64} {
  func.func @_matmul_relu_kernel(%arg0: i32, %arg1: memref<256x64xbf16, #tpu.memory_space<vmem>>, %arg2: memref<64x128xbf16, #tpu.memory_space<vmem>>, %arg3: memref<256x128xbf16, #tpu.memory_space<vmem>>) attributes {dimension_semantics = [#tpu.dimension_semantics<parallel>], iteration_bounds = array<i64: 2>, scalar_prefetch = 0 : i64, scratch_operands = 0 : i64, tpu.core_type = #tpu.core_type<tc>, window_params = [{transform_indices = @transform_0, window_bounds = array<i64: 256, 64>}, {pipeline_mode = #tpu.pipeline_mode<synchronous>, transform_indices = @transform_1, window_bounds = array<i64: 64, 128>}, {transform_indices = @transform_2, window_bounds = array<i64: 256, 128>}]} {
    %c0 = arith.constant 0 : index
    %c0_0 = arith.constant 0 : index
    %0 = vector.load %arg1[%c0, %c0_0] : memref<256x64xbf16, #tpu.memory_space<vmem>>, vector<256x64xbf16>
    %c0_1 = arith.constant 0 : index
    %c0_2 = arith.constant 0 : index
    %1 = vector.load %arg2[%c0_1, %c0_2] : memref<64x128xbf16, #tpu.memory_space<vmem>>, vector<64x128xbf16>
    %cst = arith.constant dense<0.000000e+00> : vector<256x128xf32>
    %2 = tpu.matmul %0, %1, %cst {dimension_numbers = #tpu.dot_dimension_numbers<[1], [0], [0], [1], [0, 0, 1, 1], [], []>} : vector<256x64xbf16>, vector<64x128xbf16>, vector<256x128xf32> -> vector<256x128xf32>
    %cst_3 = arith.constant 0.000000e+00 : f32
    %3 = vector.broadcast %cst_3 : f32 to vector<256x128xf32>
    %4 = arith.maximumf %2, %3 : vector<256x128xf32>
    %5 = arith.truncf %4 : vector<256x128xf32> to vector<256x128xbf16>
    %c0_4 = arith.constant 0 : index
    %c0_5 = arith.constant 0 : index
    %6 = vector.load %arg3[%c0_4, %c0_5] : memref<256x128xbf16, #tpu.memory_space<vmem>>, vector<256x128xbf16>
    tpu.vector_store %arg3[%c0_4, %c0_5], %5 {strides = array<i32>} : memref<256x128xbf16, #tpu.memory_space<vmem>>, vector<256x128xbf16>,
    return
  }
  func.func @transform_0(%arg0: i32) -> (i32, i32) {
    %c0_i32 = arith.constant 0 : i32
    %c0_i32_0 = arith.constant 0 : i32
    return %arg0, %c0_i32 : i32, i32
  }
  func.func @transform_1(%arg0: i32) -> (i32, i32) {
    %c0_i32 = arith.constant 0 : i32
    %c0_i32_0 = arith.constant 0 : i32
    %c0_i32_1 = arith.constant 0 : i32
    return %c0_i32, %c0_i32_0 : i32, i32
  }
  func.func @transform_2(%arg0: i32) -> (i32, i32) {
    %c0_i32 = arith.constant 0 : i32
    %c0_i32_0 = arith.constant 0 : i32
    return %arg0, %c0_i32 : i32, i32
  }
}

</mosaic_0001>

<llo_original>
// kernel: decoder_forward.4
$region0: #{decoder_forward.4}
  #allocation0 [shape = 'u32[]', space=smem, size = 0x4, offset = 0x4, fixed_abs, tag = 'smem constant byte address 0x4 - core index']
  #allocation1 [shape = 'u32[144,128]{1,0:T(1,128)}', space=vmem, size = 0x12000, scoped, tag = 'internal scratch']
  %s0 = inlined_call_operand.vmem [shape: bf16[64,64], index: 0, kind: input, shape index: {}]
  %s1 = inlined_call_operand.vmem [shape: bf16[64,128], index: 1, kind: input, shape index: {}]
  %s2 = inlined_call_operand.vmem [shape: bf16[64,128], index: 2, kind: output, shape index: {}]
  %s3 = sld [smem:[#allocation0]]
  $region18: #{decoder_forward.4} parent=0
    _
  %s5 = ssub.s32 1, %s3
  %s6 = scalar_select 0, %s5, %s3
  // Predicated region
  $region2: #{decoder_forward.4} parent=0 // pred_check
    _
  $region3: #{decoder_forward.4} parent=0 // pred_check_branch
    %8 = sbr.rel (0) target = $region5
  $region4: #{decoder_forward.4} parent=0 // pred_region
    _
  $region5: #{decoder_forward.4} parent=0 // pred_fallthru
    _
  // Predicated region
  $region6: #{decoder_forward.4} parent=0 // pred_check
    _
  $region7: #{decoder_forward.4} parent=0 // pred_check_branch
    %10 = sbr.rel (0) target = $region9
  $region8: #{decoder_forward.4} parent=0 // pred_region
    _
  $region9: #{decoder_forward.4} parent=0 // pred_fallthru
    _
  %v12 = vld [vmem:[%s0] sm:$0xf]
  %v13 = vld [vmem:[%s0 + $0x4] sm:$0xf]
  %v14 = vld [vmem:[%s0 + $0x8] sm:$0xf]
  %v15 = vld [vmem:[%s0 + $0xc] sm:$0xf]
  %v16 = vld [vmem:[%s0 + $0x10] sm:$0xf]
  %v17 = vld [vmem:[%s0 + $0x14] sm:$0xf]
  %v18 = vld [vmem:[%s0 + $0x18] sm:$0xf]
  %v19 = vld [vmem:[%s0 + $0x1c] sm:$0xf]
  %v20 = vld [vmem:[%s1] sm:$0xf]
  %v21 = vld [vmem:[%s1 + $0x4] sm:$0xf]
  %v22 = vld [vmem:[%s1 + $0x8] sm:$0xf]
  %v23 = vld [vmem:[%s1 + $0xc] sm:$0xf]
  %v24 = vld [vmem:[%s1 + $0x10] sm:$0xf]
  %v25 = vld [vmem:[%s1 + $0x14] sm:$0xf]
  %v26 = vld [vmem:[%s1 + $0x18] sm:$0xf]
  %v27 = vld [vmem:[%s1 + $0x1c] sm:$0xf]
  %v36 = vunpack.c.l.b16 %v12
  %v37 = vunpack.c.l.b16 %v13
  %v38 = vunpack.c.l.b16 %v14
  %v39 = vunpack.c.l.b16 %v15
  %v40 = vunpack.c.l.b16 %v16
  %v41 = vunpack.c.l.b16 %v17
  %v42 = vunpack.c.l.b16 %v18
  %v43 = vunpack.c.l.b16 %v19
  %v44 = vpack.c.b16 %v37, %v36
  %v45 = vpack.c.b16 %v39, %v38
  %v46 = vpack.c.b16 %v41, %v40
  %v47 = vpack.c.b16 %v43, %v42
  %v56 = vunpack.c.l.b16 %v20
  %v57 = vunpack.c.l.b16 %v21
  %v58 = vunpack.c.l.b16 %v22
  %v59 = vunpack.c.l.b16 %v23
  %v60 = vunpack.c.l.b16 %v24
  %v61 = vunpack.c.l.b16 %v25
  %v62 = vunpack.c.l.b16 %v26
  %v63 = vunpack.c.l.b16 %v27
  %v64 = vpack.c.b16 %v57, %v56
  %v65 = vpack.c.b16 %v59, %v58
  %v66 = vpack.c.b16 %v61, %v60
  %v67 = vpack.c.b16 %v63, %v62
  %vm72 = vcmask 523264
  %v74 = vsel %vm72, %v44, 0
  %v77 = vsel %vm72, %v45, 0
  %v80 = vsel %vm72, %v46, 0
  %v83 = vsel %vm72, %v47, 0
  %85 = vmatprep.subr.bf16.mxu0 0
  %86 = vmatpush1.bf16.msra.mxu0 0
  %87 = vmatprep.subr.bf16.mxu0 0
  %88 = vmatpush1.bf16.msra.mxu0 0
  %89 = vmatprep.subr.bf16.mxu0 0
  %90 = vmatpush1.bf16.msra.mxu0 0
  %91 = vmatprep.subr.bf16.mxu0 0
  %92 = vmatpush1.bf16.msra.mxu0 0
  %93 = vmatprep.subr.bf16.mxu0 0
  %94 = vmatpush1.bf16.msra.mxu0 %v67
  %95 = vmatprep.subr.bf16.mxu0 0
  %96 = vmatpush1.bf16.msra.mxu0 %v66
  %97 = vmatprep.subr.bf16.mxu0 0
  %98 = vmatpush1.bf16.msra.mxu0 %v65
  %99 = vmatprep.subr.bf16.mxu0 0
  %100 = vmatpush1.bf16.msra.mxu0 %v64
  %101 = vmatprep.subr.bf16.mxu0 0
  %102 = vmatpush2.bf16.msra.mxu0 0
  %103 = vmatprep.subr.bf16.mxu0 0
  %104 = vmatpush2.bf16.msra.mxu0 0
  %105 = vmatprep.subr.bf16.mxu0 0
  %106 = vmatpush2.bf16.msra.mxu0 0
  %107 = vmatprep.subr.bf16.mxu0 0
  %108 = vmatpush2.bf16.msra.mxu0 0
  %109 = vmatprep.subr.bf16.mxu0 0
  %110 = vmatpush2.bf16.msra.mxu0 0
  %111 = vmatprep.subr.bf16.mxu0 0
  %112 = vmatpush2.bf16.msra.mxu0 0
  %113 = vmatprep.subr.bf16.mxu0 0
  %114 = vmatpush2.bf16.msra.mxu0 0
  %115 = vmatprep.subr.bf16.mxu0 0
  %116 = vmatpush2.bf16.msra.mxu0 0
  %117 = vmatprep.mubr.bf16.mxu0 0
  %118 = vmatmul.mubr.bf16.gmra.mxu0 %v74
  %v119 = vpop.f32.mrf.mxu0
  %v120 = vadd.f32 0.0, %v119
  %v121 = vpop.f32.mrf.mxu0
  %v122 = vpop.f32.mrf.mxu0
  %v123 = vadd.f32 0.0, %v122
  %v124 = vpop.f32.mrf.mxu0
  %125 = vmatprep.mubr.bf16.mxu0 0
  %126 = vmatmul.mubr.bf16.gmra.mxu0 %v77
  %v127 = vpop.f32.mrf.mxu0
  %v128 = vadd.f32 0.0, %v127
  %v129 = vpop.f32.mrf.mxu0
  %v130 = vpop.f32.mrf.mxu0
  %v131 = vadd.f32 0.0, %v130
  %v132 = vpop.f32.mrf.mxu0
  %133 = vmatprep.mubr.bf16.mxu0 0
  %134 = vmatmul.mubr.bf16.gmra.mxu0 %v80
  %v135 = vpop.f32.mrf.mxu0
  %v136 = vadd.f32 0.0, %v135
  %v137 = vpop.f32.mrf.mxu0
  %v138 = vpop.f32.mrf.mxu0
  %v139 = vadd.f32 0.0, %v138
  %v140 = vpop.f32.mrf.mxu0
  %141 = vmatprep.mubr.bf16.mxu0 0
  %142 = vmatmul.mubr.bf16.gmra.mxu0 %v83
  %v143 = vpop.f32.mrf.mxu0
  %v144 = vadd.f32 0.0, %v143
  %v145 = vpop.f32.mrf.mxu0
  %v146 = vpop.f32.mrf.mxu0
  %v147 = vadd.f32 0.0, %v146
  %v148 = vpop.f32.mrf.mxu0
  %149 = vdwg.mxu0
  %v150 = vmax.f32 %v120, 0.0
  %v151 = vmax.f32 %v123, 0.0
  %v152 = vmax.f32 %v128, 0.0
  %v153 = vmax.f32 %v131, 0.0
  %v154 = vmax.f32 %v136, 0.0
  %v155 = vmax.f32 %v139, 0.0
  %v156 = vmax.f32 %v144, 0.0
  %v157 = vmax.f32 %v147, 0.0
  %v158 = vpack.c.bf16 %v151, %v150
  %v159 = vpack.c.bf16 %v153, %v152
  %v160 = vpack.c.bf16 %v155, %v154
  %v161 = vpack.c.bf16 %v157, %v156
  %v166 = vunpack.c.l.b16 %v158
  %v167 = vunpack.c.h.b16 %v158
  %v168 = vunpack.c.l.b16 %v159
  %v169 = vunpack.c.h.b16 %v159
  %v170 = vunpack.c.l.b16 %v160
  %v171 = vunpack.c.h.b16 %v160
  %v172 = vunpack.c.l.b16 %v161
  %v173 = vunpack.c.h.b16 %v161
  %v174 = vpack.c.b16 %v166, %v166
  %v175 = vpack.c.b16 %v167, %v167
  %v176 = vpack.c.b16 %v168, %v168
  %v177 = vpack.c.b16 %v169, %v169
  %v178 = vpack.c.b16 %v170, %v170
  %v179 = vpack.c.b16 %v171, %v171
  %v180 = vpack.c.b16 %v172, %v172
  %v181 = vpack.c.b16 %v173, %v173
  %190 = vst [vmem:[%s2] sm:$0xf] %v174
  %191 = vst [vmem:[%s2 + $0x4] sm:$0xf] %v175
  %192 = vst [vmem:[%s2 + $0x8] sm:$0xf] %v176
  %193 = vst [vmem:[%s2 + $0xc] sm:$0xf] %v177
  %194 = vst [vmem:[%s2 + $0x10] sm:$0xf] %v178
  %195 = vst [vmem:[%s2 + $0x14] sm:$0xf] %v179
  %196 = vst [vmem:[%s2 + $0x18] sm:$0xf] %v180
  %197 = vst [vmem:[%s2 + $0x1c] sm:$0xf] %v181
  // Predicated region
  $region10: #{decoder_forward.4} parent=0 // pred_check
    _
  $region11: #{decoder_forward.4} parent=0 // pred_check_branch
    %199 = sbr.rel (0) target = $region13
  $region12: #{decoder_forward.4} parent=0 // pred_region
    _
  $region13: #{decoder_forward.4} parent=0 // pred_fallthru
    _
  // Predicated region
  $region14: #{decoder_forward.4} parent=0 // pred_check
    _
  $region15: #{decoder_forward.4} parent=0 // pred_check_branch
    %201 = sbr.rel (0) target = $region17
  $region16: #{decoder_forward.4} parent=0 // pred_region
    _
  $region17: #{decoder_forward.4} parent=0 // pred_fallthru
    _

// kernel: decoder_forward.5
$region0: #{decoder_forward.5}
  #allocation0 [shape = 'u32[]', space=smem, size = 0x4, offset = 0x4, fixed_abs, tag = 'smem constant byte address 0x4 - core index']
  #allocation1 [shape = 'u32[144,128]{1,0:T(1,128)}', space=vmem, size = 0x12000, scoped, tag = 'internal scratch']
  %s0 = inlined_call_operand.vmem [shape: bf16[128,64], index: 0, kind: input, shape index: {}]
  %s1 = inlined_call_operand.vmem [shape: bf16[64,128], index: 1, kind: input, shape index: {}]
  %s2 = inlined_call_operand.vmem [shape: bf16[128,128], index: 2, kind: output, shape index: {}]
  %s3 = sld [smem:[#allocation0]]
  $region18: #{decoder_forward.5} parent=0
    _
  %s5 = ssub.s32 1, %s3
  %s6 = scalar_select 0, %s5, %s3
  // Predicated region
  $region2: #{decoder_forward.5} parent=0 // pred_check
    _
  $region3: #{decoder_forward.5} parent=0 // pred_check_branch
    %8 = sbr.rel (0) target = $region5
  $region4: #{decoder_forward.5} parent=0 // pred_region
    _
  $region5: #{decoder_forward.5} parent=0 // pred_fallthru
    _
  // Predicated region
  $region6: #{decoder_forward.5} parent=0 // pred_check
    _
  $region7: #{decoder_forward.5} parent=0 // pred_check_branch
    %10 = sbr.rel (0) target = $region9
  $region8: #{decoder_forward.5} parent=0 // pred_region
    _
  $region9: #{decoder_forward.5} parent=0 // pred_fallthru
    _
  %v12 = vld [vmem:[%s0] sm:$0xf]
  %v13 = vld [vmem:[%s0 + $0x4] sm:$0xf]
  %v14 = vld [vmem:[%s0 + $0x8] sm:$0xf]
  %v15 = vld [vmem:[%s0 + $0xc] sm:$0xf]
  %v16 = vld [vmem:[%s0 + $0x10] sm:$0xf]
  %v17 = vld [vmem:[%s0 + $0x14] sm:$0xf]
  %v18 = vld [vmem:[%s0 + $0x18] sm:$0xf]
  %v19 = vld [vmem:[%s0 + $0x1c] sm:$0xf]
  %v20 = vld [vmem:[%s0 + $0x20] sm:$0xf]
  %v21 = vld [vmem:[%s0 + $0x24] sm:$0xf]
  %v22 = vld [vmem:[%s0 + $0x28] sm:$0xf]
  %v23 = vld [vmem:[%s0 + $0x2c] sm:$0xf]
  %v24 = vld [vmem:[%s0 + $0x30] sm:$0xf]
  %v25 = vld [vmem:[%s0 + $0x34] sm:$0xf]
  %v26 = vld [vmem:[%s0 + $0x38] sm:$0xf]
  %v27 = vld [vmem:[%s0 + $0x3c] sm:$0xf]
  %v28 = vld [vmem:[%s1] sm:$0xf]
  %v29 = vld [vmem:[%s1 + $0x4] sm:$0xf]
  %v30 = vld [vmem:[%s1 + $0x8] sm:$0xf]
  %v31 = vld [vmem:[%s1 + $0xc] sm:$0xf]
  %v32 = vld [vmem:[%s1 + $0x10] sm:$0xf]
  %v33 = vld [vmem:[%s1 + $0x14] sm:$0xf]
  %v34 = vld [vmem:[%s1 + $0x18] sm:$0xf]
  %v35 = vld [vmem:[%s1 + $0x1c] sm:$0xf]
  %v52 = vunpack.c.l.b16 %v12
  %v53 = vunpack.c.l.b16 %v13
  %v54 = vunpack.c.l.b16 %v14
  %v55 = vunpack.c.l.b16 %v15
  %v56 = vunpack.c.l.b16 %v16
  %v57 = vunpack.c.l.b16 %v17
  %v58 = vunpack.c.l.b16 %v18
  %v59 = vunpack.c.l.b16 %v19
  %v60 = vunpack.c.l.b16 %v20
  %v61 = vunpack.c.l.b16 %v21
  %v62 = vunpack.c.l.b16 %v22
  %v63 = vunpack.c.l.b16 %v23
  %v64 = vunpack.c.l.b16 %v24
  %v65 = vunpack.c.l.b16 %v25
  %v66 = vunpack.c.l.b16 %v26
  %v67 = vunpack.c.l.b16 %v27
  %v68 = vpack.c.b16 %v53, %v52
  %v69 = vpack.c.b16 %v55, %v54
  %v70 = vpack.c.b16 %v57, %v56
  %v71 = vpack.c.b16 %v59, %v58
  %v72 = vpack.c.b16 %v61, %v60
  %v73 = vpack.c.b16 %v63, %v62
  %v74 = vpack.c.b16 %v65, %v64
  %v75 = vpack.c.b16 %v67, %v66
  %v84 = vunpack.c.l.b16 %v28
  %v85 = vunpack.c.l.b16 %v29
  %v86 = vunpack.c.l.b16 %v30
  %v87 = vunpack.c.l.b16 %v31
  %v88 = vunpack.c.l.b16 %v32
  %v89 = vunpack.c.l.b16 %v33
  %v90 = vunpack.c.l.b16 %v34
  %v91 = vunpack.c.l.b16 %v35
  %v92 = vpack.c.b16 %v85, %v84
  %v93 = vpack.c.b16 %v87, %v86
  %v94 = vpack.c.b16 %v89, %v88
  %v95 = vpack.c.b16 %v91, %v90
  %vm100 = vcmask 523264
  %v102 = vsel %vm100, %v68, 0
  %v105 = vsel %vm100, %v69, 0
  %v108 = vsel %vm100, %v70, 0
  %v111 = vsel %vm100, %v71, 0
  %v114 = vsel %vm100, %v72, 0
  %v117 = vsel %vm100, %v73, 0
  %v120 = vsel %vm100, %v74, 0
  %v123 = vsel %vm100, %v75, 0
  %125 = vmatprep.subr.bf16.mxu0 0
  %126 = vmatpush1.bf16.msra.mxu0 0
  %127 = vmatprep.subr.bf16.mxu0 0
  %128 = vmatpush1.bf16.msra.mxu0 0
  %129 = vmatprep.subr.bf16.mxu0 0
  %130 = vmatpush1.bf16.msra.mxu0 0
  %131 = vmatprep.subr.bf16.mxu0 0
  %132 = vmatpush1.bf16.msra.mxu0 0
  %133 = vmatprep.subr.bf16.mxu0 0
  %134 = vmatpush1.bf16.msra.mxu0 %v95
  %135 = vmatprep.subr.bf16.mxu0 0
  %136 = vmatpush1.bf16.msra.mxu0 %v94
  %137 = vmatprep.subr.bf16.mxu0 0
  %138 = vmatpush1.bf16.msra.mxu0 %v93
  %139 = vmatprep.subr.bf16.mxu0 0
  %140 = vmatpush1.bf16.msra.mxu0 %v92
  %141 = vmatprep.subr.bf16.mxu0 0
  %142 = vmatpush2.bf16.msra.mxu0 0
  %143 = vmatprep.subr.bf16.mxu0 0
  %144 = vmatpush2.bf16.msra.mxu0 0
  %145 = vmatprep.subr.bf16.mxu0 0
  %146 = vmatpush2.bf16.msra.mxu0 0
  %147 = vmatprep.subr.bf16.mxu0 0
  %148 = vmatpush2.bf16.msra.mxu0 0
  %149 = vmatprep.subr.bf16.mxu0 0
  %150 = vmatpush2.bf16.msra.mxu0 0
  %151 = vmatprep.subr.bf16.mxu0 0
  %152 = vmatpush2.bf16.msra.mxu0 0
  %153 = vmatprep.subr.bf16.mxu0 0
  %154 = vmatpush2.bf16.msra.mxu0 0
  %155 = vmatprep.subr.bf16.mxu0 0
  %156 = vmatpush2.bf16.msra.mxu0 0
  %157 = vmatprep.mubr.bf16.mxu0 0
  %158 = vmatmul.mubr.bf16.gmra.mxu0 %v102
  %v159 = vpop.f32.mrf.mxu0
  %v160 = vadd.f32 0.0, %v159
  %v161 = vpop.f32.mrf.mxu0
  %v162 = vpop.f32.mrf.mxu0
  %v163 = vadd.f32 0.0, %v162
  %v164 = vpop.f32.mrf.mxu0
  %165 = vmatprep.mubr.bf16.mxu0 0
  %166 = vmatmul.mubr.bf16.gmra.mxu0 %v105
  %v167 = vpop.f32.mrf.mxu0
  %v168 = vadd.f32 0.0, %v167
  %v169 = vpop.f32.mrf.mxu0
  %v170 = vpop.f32.mrf.mxu0
  %v171 = vadd.f32 0.0, %v170
  %v172 = vpop.f32.mrf.mxu0
  %173 = vmatprep.mubr.bf16.mxu0 0
  %174 = vmatmul.mubr.bf16.gmra.mxu0 %v108
  %v175 = vpop.f32.mrf.mxu0
  %v176 = vadd.f32 0.0, %v175
  %v177 = vpop.f32.mrf.mxu0
  %v178 = vpop.f32.mrf.mxu0
  %v179 = vadd.f32 0.0, %v178
  %v180 = vpop.f32.mrf.mxu0
  %181 = vmatprep.mubr.bf16.mxu0 0
  %182 = vmatmul.mubr.bf16.gmra.mxu0 %v111
  %v183 = vpop.f32.mrf.mxu0
  %v184 = vadd.f32 0.0, %v183
  %v185 = vpop.f32.mrf.mxu0
  %v186 = vpop.f32.mrf.mxu0
  %v187 = vadd.f32 0.0, %v186
  %v188 = vpop.f32.mrf.mxu0
  %189 = vmatprep.mubr.bf16.mxu0 0
  %190 = vmatmul.mubr.bf16.gmra.mxu0 %v114
  %v191 = vpop.f32.mrf.mxu0
  %v192 = vadd.f32 0.0, %v191
  %v193 = vpop.f32.mrf.mxu0
  %v194 = vpop.f32.mrf.mxu0
  %v195 = vadd.f32 0.0, %v194
  %v196 = vpop.f32.mrf.mxu0
  %197 = vmatprep.mubr.bf16.mxu0 0
  %198 = vmatmul.mubr.bf16.gmra.mxu0 %v117
  %v199 = vpop.f32.mrf.mxu0
  %v200 = vadd.f32 0.0, %v199
  %v201 = vpop.f32.mrf.mxu0
  %v202 = vpop.f32.mrf.mxu0
  %v203 = vadd.f32 0.0, %v202
  %v204 = vpop.f32.mrf.mxu0
  %205 = vmatprep.mubr.bf16.mxu0 0
  %206 = vmatmul.mubr.bf16.gmra.mxu0 %v120
  %v207 = vpop.f32.mrf.mxu0
  %v208 = vadd.f32 0.0, %v207
  %v209 = vpop.f32.mrf.mxu0
  %v210 = vpop.f32.mrf.mxu0
  %v211 = vadd.f32 0.0, %v210
  %v212 = vpop.f32.mrf.mxu0
  %213 = vmatprep.mubr.bf16.mxu0 0
  %214 = vmatmul.mubr.bf16.gmra.mxu0 %v123
  %v215 = vpop.f32.mrf.mxu0
  %v216 = vadd.f32 0.0, %v215
  %v217 = vpop.f32.mrf.mxu0
  %v218 = vpop.f32.mrf.mxu0
  %v219 = vadd.f32 0.0, %v218
  %v220 = vpop.f32.mrf.mxu0
  %221 = vdwg.mxu0
  %v222 = vmax.f32 %v160, 0.0
  %v223 = vmax.f32 %v163, 0.0
  %v224 = vmax.f32 %v168, 0.0
  %v225 = vmax.f32 %v171, 0.0
  %v226 = vmax.f32 %v176, 0.0
  %v227 = vmax.f32 %v179, 0.0
  %v228 = vmax.f32 %v184, 0.0
  %v229 = vmax.f32 %v187, 0.0
  %v230 = vmax.f32 %v192, 0.0
  %v231 = vmax.f32 %v195, 0.0
  %v232 = vmax.f32 %v200, 0.0
  %v233 = vmax.f32 %v203, 0.0
  %v234 = vmax.f32 %v208, 0.0
  %v235 = vmax.f32 %v211, 0.0
  %v236 = vmax.f32 %v216, 0.0
  %v237 = vmax.f32 %v219, 0.0
  %v238 = vpack.c.bf16 %v223, %v222
  %v239 = vpack.c.bf16 %v225, %v224
  %v240 = vpack.c.bf16 %v227, %v226
  %v241 = vpack.c.bf16 %v229, %v228
  %v242 = vpack.c.bf16 %v231, %v230
  %v243 = vpack.c.bf16 %v233, %v232
  %v244 = vpack.c.bf16 %v235, %v234
  %v245 = vpack.c.bf16 %v237, %v236
  %v254 = vunpack.c.l.b16 %v238
  %v255 = vunpack.c.h.b16 %v238
  %v256 = vunpack.c.l.b16 %v239
  %v257 = vunpack.c.h.b16 %v239
  %v258 = vunpack.c.l.b16 %v240
  %v259 = vunpack.c.h.b16 %v240
  %v260 = vunpack.c.l.b16 %v241
  %v261 = vunpack.c.h.b16 %v241
  %v262 = vunpack.c.l.b16 %v242
  %v263 = vunpack.c.h.b16 %v242
  %v264 = vunpack.c.l.b16 %v243
  %v265 = vunpack.c.h.b16 %v243
  %v266 = vunpack.c.l.b16 %v244
  %v267 = vunpack.c.h.b16 %v244
  %v268 = vunpack.c.l.b16 %v245
  %v269 = vunpack.c.h.b16 %v245
  %v270 = vpack.c.b16 %v254, %v254
  %v271 = vpack.c.b16 %v255, %v255
  %v272 = vpack.c.b16 %v256, %v256
  %v273 = vpack.c.b16 %v257, %v257
  %v274 = vpack.c.b16 %v258, %v258
  %v275 = vpack.c.b16 %v259, %v259
  %v276 = vpack.c.b16 %v260, %v260
  %v277 = vpack.c.b16 %v261, %v261
  %v278 = vpack.c.b16 %v262, %v262
  %v279 = vpack.c.b16 %v263, %v263
  %v280 = vpack.c.b16 %v264, %v264
  %v281 = vpack.c.b16 %v265, %v265
  %v282 = vpack.c.b16 %v266, %v266
  %v283 = vpack.c.b16 %v267, %v267
  %v284 = vpack.c.b16 %v268, %v268
  %v285 = vpack.c.b16 %v269, %v269
  %302 = vst [vmem:[%s2] sm:$0xf] %v270
  %303 = vst [vmem:[%s2 + $0x4] sm:$0xf] %v271
  %304 = vst [vmem:[%s2 + $0x8] sm:$0xf] %v272
  %305 = vst [vmem:[%s2 + $0xc] sm:$0xf] %v273
  %306 = vst [vmem:[%s2 + $0x10] sm:$0xf] %v274
  %307 = vst [vmem:[%s2 + $0x14] sm:$0xf] %v275
  %308 = vst [vmem:[%s2 + $0x18] sm:$0xf] %v276
  %309 = vst [vmem:[%s2 + $0x1c] sm:$0xf] %v277
  %310 = vst [vmem:[%s2 + $0x20] sm:$0xf] %v278
  %311 = vst [vmem:[%s2 + $0x24] sm:$0xf] %v279
  %312 = vst [vmem:[%s2 + $0x28] sm:$0xf] %v280
  %313 = vst [vmem:[%s2 + $0x2c] sm:$0xf] %v281
  %314 = vst [vmem:[%s2 + $0x30] sm:$0xf] %v282
  %315 = vst [vmem:[%s2 + $0x34] sm:$0xf] %v283
  %316 = vst [vmem:[%s2 + $0x38] sm:$0xf] %v284
  %317 = vst [vmem:[%s2 + $0x3c] sm:$0xf] %v285
  // Predicated region
  $region10: #{decoder_forward.5} parent=0 // pred_check
    _
  $region11: #{decoder_forward.5} parent=0 // pred_check_branch
    %319 = sbr.rel (0) target = $region13
  $region12: #{decoder_forward.5} parent=0 // pred_region
    _
  $region13: #{decoder_forward.5} parent=0 // pred_fallthru
    _
  // Predicated region
  $region14: #{decoder_forward.5} parent=0 // pred_check
    _
  $region15: #{decoder_forward.5} parent=0 // pred_check_branch
    %321 = sbr.rel (0) target = $region17
  $region16: #{decoder_forward.5} parent=0 // pred_region
    _
  $region17: #{decoder_forward.5} parent=0 // pred_fallthru
    _

// kernel: decoder_forward.6
$region0: #{decoder_forward.6}
  #allocation0 [shape = 'u32[]', space=smem, size = 0x4, offset = 0x4, fixed_abs, tag = 'smem constant byte address 0x4 - core index']
  #allocation1 [shape = 'u32[144,128]{1,0:T(1,128)}', space=vmem, size = 0x12000, scoped, tag = 'internal scratch']
  %s0 = inlined_call_operand.vmem [shape: bf16[256,64], index: 0, kind: input, shape index: {}]
  %s1 = inlined_call_operand.vmem [shape: bf16[64,128], index: 1, kind: input, shape index: {}]
  %s2 = inlined_call_operand.vmem [shape: bf16[256,128], index: 2, kind: output, shape index: {}]
  %s3 = sld [smem:[#allocation0]]
  $region41: #{decoder_forward.6} parent=0
    _
  %s5 = ssub.s32 1, %s3
  %s6 = scalar_select 0, %s5, %s3
  loop: start=0, step=1, limit=4
  $region2: #{decoder_forward.6} parent=0 // loop_pre_header
    _
  $region3: #{decoder_forward.6} parent=0 // loop_header
    %s8 = sphi 0, %s12
    %p9 = scmp.ge.s32.totalorder %s8, 4
    %s18 = sphi 0, %s20
    %s21 = sphi 0, %s18
    %s22 = sphi 0, %s21
    %s38 = sphi 0, %s22
    %s42 = sphi 0, %s42
    %s44 = sphi 0, %s42
    %s45 = sphi 0, %s44
    %s59 = sphi 0, %s45
    %s65 = sphi 0, %s67
    %s68 = sphi 0, %s65
    %s69 = sphi 0, %s68
    %s85 = sphi 0, %s69
  $region4: #{decoder_forward.6} parent=0 // loop_header_branch
    %11 = sbr.rel (%p9) target = $region8
  $region5: #{decoder_forward.6} parent=0 // loop_body
    %s13 = ssub.s32 %s8, 1
    %s14 = ssub.s32 %s8, 2
    %s15 = sadd.s32 %s8, 1
    %s16 = ssub.s32 %s8, %s15
    %p17 = scmp.eq.s32.totalorder %s16, 0
    %s19 = sadd.s32 %s18, 1
    %s20 = scalar_select %p17, %s18, %s19
    %p23 = pneg %p17
    %p24 = scmp.eq.s32.totalorder %s8, 1
    %p25 = por %p23, %p24
    %p26 = scmp.ne.s32.totalorder %s18, %s21
    %p27 = scmp.eq.s32.totalorder %s8, 0
    %p28 = por %p26, %p27
    %p29 = scmp.ne.s32.totalorder %s18, %s21
    %p30 = scmp.eq.s32.totalorder %s13, 1
    %p31 = por %p29, %p30
    %p32 = scmp.ne.s32.totalorder %s21, %s22
    %p33 = scmp.eq.s32.totalorder %s13, 0
    %p34 = por %p32, %p33
    %p35 = scmp.ne.s32.totalorder %s21, %s22
    %p36 = scmp.eq.s32.totalorder %s14, 1
    %p37 = por %p35, %p36
    %p39 = scmp.ne.s32.totalorder %s22, %s38
    %p40 = scmp.eq.s32.totalorder %s14, 0
    %p41 = por %p39, %p40
    %s43 = sadd.s32 %s42, 1
    %p46 = scmp.eq.s32.totalorder %s8, 1
    %p47 = scmp.ne.s32.totalorder %s42, %s44
    %p48 = scmp.eq.s32.totalorder %s8, 0
    %p49 = por %p47, %p48
    %p50 = scmp.ne.s32.totalorder %s42, %s44
    %p51 = scmp.eq.s32.totalorder %s13, 1
    %p52 = por %p50, %p51
    %p53 = scmp.ne.s32.totalorder %s44, %s45
    %p54 = scmp.eq.s32.totalorder %s13, 0
    %p55 = por %p53, %p54
    %p56 = scmp.ne.s32.totalorder %s44, %s45
    %p57 = scmp.eq.s32.totalorder %s14, 1
    %p58 = por %p56, %p57
    %p60 = scmp.ne.s32.totalorder %s45, %s59
    %p61 = scmp.eq.s32.totalorder %s14, 0
    %p62 = por %p60, %p61
    %s63 = ssub.s32 %s8, %s15
    %p64 = scmp.eq.s32.totalorder %s63, 0
    %s66 = sadd.s32 %s65, 1
    %s67 = scalar_select %p64, %s65, %s66
    %p70 = pneg %p64
    %p71 = scmp.eq.s32.totalorder %s8, 1
    %p72 = por %p70, %p71
    %p73 = scmp.ne.s32.totalorder %s65, %s68
    %p74 = scmp.eq.s32.totalorder %s8, 0
    %p75 = por %p73, %p74
    %p76 = scmp.ne.s32.totalorder %s65, %s68
    %p77 = scmp.eq.s32.totalorder %s13, 1
    %p78 = por %p76, %p77
    %p79 = scmp.ne.s32.totalorder %s68, %s69
    %p80 = scmp.eq.s32.totalorder %s13, 0
    %p81 = por %p79, %p80
    %p82 = scmp.ne.s32.totalorder %s68, %s69
    %p83 = scmp.eq.s32.totalorder %s14, 1
    %p84 = por %p82, %p83
    %p86 = scmp.ne.s32.totalorder %s69, %s85
    %p87 = scmp.eq.s32.totalorder %s14, 0
    %p88 = por %p86, %p87
    %p89 = scmp.le.s32.totalorder 1, %s8
    %p90 = scmp.lt.s32.totalorder %s8, 3
    %p91 = pnand %p89, %p90
    %p92 = pneg %p91
    // Predicated region
    $region9: #{decoder_forward.6} parent=5 // pred_check
      _
    $region10: #{decoder_forward.6} parent=5 // pred_check_branch
      %94 = sbr.rel (%p91) target = $region12
    $region11: #{decoder_forward.6} parent=5 // pred_region
      %s95 = ssub.s32 %s8, 1
      // Predicated region
      $region13: #{decoder_forward.6} parent=11 // pred_check
        %p96 = pneg %p55
      $region14: #{decoder_forward.6} parent=11 // pred_check_branch
        %98 = sbr.rel (%p96) target = $region16
      $region15: #{decoder_forward.6} parent=11 // pred_region
        _
      $region16: #{decoder_forward.6} parent=11 // pred_fallthru
        _
    $region12: #{decoder_forward.6} parent=5 // pred_fallthru
      _
    %p99 = scmp.lt.s32.totalorder %s8, 2
    // Predicated region
    $region17: #{decoder_forward.6} parent=5 // pred_check
      %p100 = pneg %p99
    $region18: #{decoder_forward.6} parent=5 // pred_check_branch
      %102 = sbr.rel (%p100) target = $region20
    $region19: #{decoder_forward.6} parent=5 // pred_region
      // Predicated region
      $region21: #{decoder_forward.6} parent=19 // pred_check
        %p103 = pneg %p28
      $region22: #{decoder_forward.6} parent=19 // pred_check_branch
        %105 = sbr.rel (%p103) target = $region24
      $region23: #{decoder_forward.6} parent=19 // pred_region
        %s106 = smul.u32 16, %s8
        %p107 = scmp.lt.s32.totalorder %s106, 31
        %s108 = scalar_select %p107, %s106, 31
        %s109 = smul.addr %s108, 4
        %s110 = scalar_lea.vmem %s0, %s109
        %s111 = smul.u32 16, %s8
      $region24: #{decoder_forward.6} parent=19 // pred_fallthru
        _
    $region20: #{decoder_forward.6} parent=5 // pred_fallthru
      _
    %p112 = scmp.le.s32.totalorder 1, %s8
    %p113 = scmp.lt.s32.totalorder %s8, 3
    %p114 = pnand %p112, %p113
    %p115 = pneg %p114
    // Predicated region
    $region25: #{decoder_forward.6} parent=5 // pred_check
      _
    $region26: #{decoder_forward.6} parent=5 // pred_check_branch
      %117 = sbr.rel (%p114) target = $region28
    $region27: #{decoder_forward.6} parent=5 // pred_region
      %s118 = ssub.s32 %s8, 1
      %s119 = smul.u32 16, %s13
      %p120 = scmp.lt.s32.totalorder %s119, 31
      %s121 = scalar_select %p120, %s119, 31
      %s122 = smul.addr %s121, 4
      %s123 = scalar_lea.vmem %s0, %s122
      %p124 = pneg %p34
      %p125 = pneg %p31
      %p126 = pneg %p55
      %p127 = pneg %p52
      %p128 = pneg %p81
      %p129 = pneg %p78
      %s130 = smul.u32 16, %s13
      %p131 = scmp.lt.s32.totalorder %s130, 31
      %s132 = scalar_select %p131, %s130, 31
      %s133 = smul.addr %s132, 4
      %s134 = scalar_lea.vmem %s2, %s133
      %s135 = smul.u32 16, %s13
      %p136 = scmp.lt.s32.totalorder %s135, 31
      %s137 = scalar_select %p136, %s135, 31
      %s138 = smul.addr %s137, 4
      %s139 = scalar_lea.vmem %s0, %s138
      %s140 = smul.u32 16, %s13
      %s141 = smul.u32 16, %s13
      %p142 = scmp.lt.s32.totalorder %s141, 31
      %s143 = scalar_select %p142, %s141, 31
      %s144 = smul.addr %s143, 4
      %s145 = scalar_lea.vmem %s2, %s144
      %s146 = smul.u32 16, %s13
      %v148 = vld [vmem:[%s139] sm:$0xf]
      %v149 = vld [vmem:[%s139 + $0x4] sm:$0xf]
      %v150 = vld [vmem:[%s139 + $0x8] sm:$0xf]
      %v151 = vld [vmem:[%s139 + $0xc] sm:$0xf]
      %v152 = vld [vmem:[%s139 + $0x10] sm:$0xf]
      %v153 = vld [vmem:[%s139 + $0x14] sm:$0xf]
      %v154 = vld [vmem:[%s139 + $0x18] sm:$0xf]
      %v155 = vld [vmem:[%s139 + $0x1c] sm:$0xf]
      %v156 = vld [vmem:[%s139 + $0x20] sm:$0xf]
      %v157 = vld [vmem:[%s139 + $0x24] sm:$0xf]
      %v158 = vld [vmem:[%s139 + $0x28] sm:$0xf]
      %v159 = vld [vmem:[%s139 + $0x2c] sm:$0xf]
      %v160 = vld [vmem:[%s139 + $0x30] sm:$0xf]
      %v161 = vld [vmem:[%s139 + $0x34] sm:$0xf]
      %v162 = vld [vmem:[%s139 + $0x38] sm:$0xf]
      %v163 = vld [vmem:[%s139 + $0x3c] sm:$0xf]
      %v164 = vld [vmem:[%s1] sm:$0xf]
      %v165 = vld [vmem:[%s1 + $0x4] sm:$0xf]
      %v166 = vld [vmem:[%s1 + $0x8] sm:$0xf]
      %v167 = vld [vmem:[%s1 + $0xc] sm:$0xf]
      %v168 = vld [vmem:[%s1 + $0x10] sm:$0xf]
      %v169 = vld [vmem:[%s1 + $0x14] sm:$0xf]
      %v170 = vld [vmem:[%s1 + $0x18] sm:$0xf]
      %v171 = vld [vmem:[%s1 + $0x1c] sm:$0xf]
      %v188 = vunpack.c.l.b16 %v148
      %v189 = vunpack.c.l.b16 %v149
      %v190 = vunpack.c.l.b16 %v150
      %v191 = vunpack.c.l.b16 %v151
      %v192 = vunpack.c.l.b16 %v152
      %v193 = vunpack.c.l.b16 %v153
      %v194 = vunpack.c.l.b16 %v154
      %v195 = vunpack.c.l.b16 %v155
      %v196 = vunpack.c.l.b16 %v156
      %v197 = vunpack.c.l.b16 %v157
      %v198 = vunpack.c.l.b16 %v158
      %v199 = vunpack.c.l.b16 %v159
      %v200 = vunpack.c.l.b16 %v160
      %v201 = vunpack.c.l.b16 %v161
      %v202 = vunpack.c.l.b16 %v162
      %v203 = vunpack.c.l.b16 %v163
      %v204 = vpack.c.b16 %v189, %v188
      %v205 = vpack.c.b16 %v191, %v190
      %v206 = vpack.c.b16 %v193, %v192
      %v207 = vpack.c.b16 %v195, %v194
      %v208 = vpack.c.b16 %v197, %v196
      %v209 = vpack.c.b16 %v199, %v198
      %v210 = vpack.c.b16 %v201, %v200
      %v211 = vpack.c.b16 %v203, %v202
      %v220 = vunpack.c.l.b16 %v164
      %v221 = vunpack.c.l.b16 %v165
      %v222 = vunpack.c.l.b16 %v166
      %v223 = vunpack.c.l.b16 %v167
      %v224 = vunpack.c.l.b16 %v168
      %v225 = vunpack.c.l.b16 %v169
      %v226 = vunpack.c.l.b16 %v170
      %v227 = vunpack.c.l.b16 %v171
      %v228 = vpack.c.b16 %v221, %v220
      %v229 = vpack.c.b16 %v223, %v222
      %v230 = vpack.c.b16 %v225, %v224
      %v231 = vpack.c.b16 %v227, %v226
      %vm236 = vcmask 523264
      %v238 = vsel %vm236, %v204, 0
      %v241 = vsel %vm236, %v205, 0
      %v244 = vsel %vm236, %v206, 0
      %v247 = vsel %vm236, %v207, 0
      %v250 = vsel %vm236, %v208, 0
      %v253 = vsel %vm236, %v209, 0
      %v256 = vsel %vm236, %v210, 0
      %v259 = vsel %vm236, %v211, 0
      %261 = vmatprep.subr.bf16.mxu0 0
      %262 = vmatpush1.bf16.msra.mxu0 0
      %263 = vmatprep.subr.bf16.mxu0 0
      %264 = vmatpush1.bf16.msra.mxu0 0
      %265 = vmatprep.subr.bf16.mxu0 0
      %266 = vmatpush1.bf16.msra.mxu0 0
      %267 = vmatprep.subr.bf16.mxu0 0
      %268 = vmatpush1.bf16.msra.mxu0 0
      %269 = vmatprep.subr.bf16.mxu0 0
      %270 = vmatpush1.bf16.msra.mxu0 %v231
      %271 = vmatprep.subr.bf16.mxu0 0
      %272 = vmatpush1.bf16.msra.mxu0 %v230
      %273 = vmatprep.subr.bf16.mxu0 0
      %274 = vmatpush1.bf16.msra.mxu0 %v229
      %275 = vmatprep.subr.bf16.mxu0 0
      %276 = vmatpush1.bf16.msra.mxu0 %v228
      %277 = vmatprep.subr.bf16.mxu0 0
      %278 = vmatpush2.bf16.msra.mxu0 0
      %279 = vmatprep.subr.bf16.mxu0 0
      %280 = vmatpush2.bf16.msra.mxu0 0
      %281 = vmatprep.subr.bf16.mxu0 0
      %282 = vmatpush2.bf16.msra.mxu0 0
      %283 = vmatprep.subr.bf16.mxu0 0
      %284 = vmatpush2.bf16.msra.mxu0 0
      %285 = vmatprep.subr.bf16.mxu0 0
      %286 = vmatpush2.bf16.msra.mxu0 0
      %287 = vmatprep.subr.bf16.mxu0 0
      %288 = vmatpush2.bf16.msra.mxu0 0
      %289 = vmatprep.subr.bf16.mxu0 0
      %290 = vmatpush2.bf16.msra.mxu0 0
      %291 = vmatprep.subr.bf16.mxu0 0
      %292 = vmatpush2.bf16.msra.mxu0 0
      %293 = vmatprep.mubr.bf16.mxu0 0
      %294 = vmatmul.mubr.bf16.gmra.mxu0 %v238
      %v295 = vpop.f32.mrf.mxu0
      %v296 = vadd.f32 0.0, %v295
      %v297 = vpop.f32.mrf.mxu0
      %v298 = vpop.f32.mrf.mxu0
      %v299 = vadd.f32 0.0, %v298
      %v300 = vpop.f32.mrf.mxu0
      %301 = vmatprep.mubr.bf16.mxu0 0
      %302 = vmatmul.mubr.bf16.gmra.mxu0 %v241
      %v303 = vpop.f32.mrf.mxu0
      %v304 = vadd.f32 0.0, %v303
      %v305 = vpop.f32.mrf.mxu0
      %v306 = vpop.f32.mrf.mxu0
      %v307 = vadd.f32 0.0, %v306
      %v308 = vpop.f32.mrf.mxu0
      %309 = vmatprep.mubr.bf16.mxu0 0
      %310 = vmatmul.mubr.bf16.gmra.mxu0 %v244
      %v311 = vpop.f32.mrf.mxu0
      %v312 = vadd.f32 0.0, %v311
      %v313 = vpop.f32.mrf.mxu0
      %v314 = vpop.f32.mrf.mxu0
      %v315 = vadd.f32 0.0, %v314
      %v316 = vpop.f32.mrf.mxu0
      %317 = vmatprep.mubr.bf16.mxu0 0
      %318 = vmatmul.mubr.bf16.gmra.mxu0 %v247
      %v319 = vpop.f32.mrf.mxu0
      %v320 = vadd.f32 0.0, %v319
      %v321 = vpop.f32.mrf.mxu0
      %v322 = vpop.f32.mrf.mxu0
      %v323 = vadd.f32 0.0, %v322
      %v324 = vpop.f32.mrf.mxu0
      %325 = vmatprep.mubr.bf16.mxu0 0
      %326 = vmatmul.mubr.bf16.gmra.mxu0 %v250
      %v327 = vpop.f32.mrf.mxu0
      %v328 = vadd.f32 0.0, %v327
      %v329 = vpop.f32.mrf.mxu0
      %v330 = vpop.f32.mrf.mxu0
      %v331 = vadd.f32 0.0, %v330
      %v332 = vpop.f32.mrf.mxu0
      %333 = vmatprep.mubr.bf16.mxu0 0
      %334 = vmatmul.mubr.bf16.gmra.mxu0 %v253
      %v335 = vpop.f32.mrf.mxu0
      %v336 = vadd.f32 0.0, %v335
      %v337 = vpop.f32.mrf.mxu0
      %v338 = vpop.f32.mrf.mxu0
      %v339 = vadd.f32 0.0, %v338
      %v340 = vpop.f32.mrf.mxu0
      %341 = vmatprep.mubr.bf16.mxu0 0
      %342 = vmatmul.mubr.bf16.gmra.mxu0 %v256
      %v343 = vpop.f32.mrf.mxu0
      %v344 = vadd.f32 0.0, %v343
      %v345 = vpop.f32.mrf.mxu0
      %v346 = vpop.f32.mrf.mxu0
      %v347 = vadd.f32 0.0, %v346
      %v348 = vpop.f32.mrf.mxu0
      %349 = vmatprep.mubr.bf16.mxu0 0
      %350 = vmatmul.mubr.bf16.gmra.mxu0 %v259
      %v351 = vpop.f32.mrf.mxu0
      %v352 = vadd.f32 0.0, %v351
      %v353 = vpop.f32.mrf.mxu0
      %v354 = vpop.f32.mrf.mxu0
      %v355 = vadd.f32 0.0, %v354
      %v356 = vpop.f32.mrf.mxu0
      %357 = vdwg.mxu0
      %v358 = vmax.f32 %v296, 0.0
      %v359 = vmax.f32 %v299, 0.0
      %v360 = vmax.f32 %v304, 0.0
      %v361 = vmax.f32 %v307, 0.0
      %v362 = vmax.f32 %v312, 0.0
      %v363 = vmax.f32 %v315, 0.0
      %v364 = vmax.f32 %v320, 0.0
      %v365 = vmax.f32 %v323, 0.0
      %v366 = vmax.f32 %v328, 0.0
      %v367 = vmax.f32 %v331, 0.0
      %v368 = vmax.f32 %v336, 0.0
      %v369 = vmax.f32 %v339, 0.0
      %v370 = vmax.f32 %v344, 0.0
      %v371 = vmax.f32 %v347, 0.0
      %v372 = vmax.f32 %v352, 0.0
      %v373 = vmax.f32 %v355, 0.0
      %v374 = vpack.c.bf16 %v359, %v358
      %v375 = vpack.c.bf16 %v361, %v360
      %v376 = vpack.c.bf16 %v363, %v362
      %v377 = vpack.c.bf16 %v365, %v364
      %v378 = vpack.c.bf16 %v367, %v366
      %v379 = vpack.c.bf16 %v369, %v368
      %v380 = vpack.c.bf16 %v371, %v370
      %v381 = vpack.c.bf16 %v373, %v372
      %v390 = vunpack.c.l.b16 %v374
      %v391 = vunpack.c.h.b16 %v374
      %v392 = vunpack.c.l.b16 %v375
      %v393 = vunpack.c.h.b16 %v375
      %v394 = vunpack.c.l.b16 %v376
      %v395 = vunpack.c.h.b16 %v376
      %v396 = vunpack.c.l.b16 %v377
      %v397 = vunpack.c.h.b16 %v377
      %v398 = vunpack.c.l.b16 %v378
      %v399 = vunpack.c.h.b16 %v378
      %v400 = vunpack.c.l.b16 %v379
      %v401 = vunpack.c.h.b16 %v379
      %v402 = vunpack.c.l.b16 %v380
      %v403 = vunpack.c.h.b16 %v380
      %v404 = vunpack.c.l.b16 %v381
      %v405 = vunpack.c.h.b16 %v381
      %v406 = vpack.c.b16 %v390, %v390
      %v407 = vpack.c.b16 %v391, %v391
      %v408 = vpack.c.b16 %v392, %v392
      %v409 = vpack.c.b16 %v393, %v393
      %v410 = vpack.c.b16 %v394, %v394
      %v411 = vpack.c.b16 %v395, %v395
      %v412 = vpack.c.b16 %v396, %v396
      %v413 = vpack.c.b16 %v397, %v397
      %v414 = vpack.c.b16 %v398, %v398
      %v415 = vpack.c.b16 %v399, %v399
      %v416 = vpack.c.b16 %v400, %v400
      %v417 = vpack.c.b16 %v401, %v401
      %v418 = vpack.c.b16 %v402, %v402
      %v419 = vpack.c.b16 %v403, %v403
      %v420 = vpack.c.b16 %v404, %v404
      %v421 = vpack.c.b16 %v405, %v405
      %438 = vst [vmem:[%s145] sm:$0xf] %v406
      %439 = vst [vmem:[%s145 + $0x4] sm:$0xf] %v407
      %440 = vst [vmem:[%s145 + $0x8] sm:$0xf] %v408
      %441 = vst [vmem:[%s145 + $0xc] sm:$0xf] %v409
      %442 = vst [vmem:[%s145 + $0x10] sm:$0xf] %v410
      %443 = vst [vmem:[%s145 + $0x14] sm:$0xf] %v411
      %444 = vst [vmem:[%s145 + $0x18] sm:$0xf] %v412
      %445 = vst [vmem:[%s145 + $0x1c] sm:$0xf] %v413
      %446 = vst [vmem:[%s145 + $0x20] sm:$0xf] %v414
      %447 = vst [vmem:[%s145 + $0x24] sm:$0xf] %v415
      %448 = vst [vmem:[%s145 + $0x28] sm:$0xf] %v416
      %449 = vst [vmem:[%s145 + $0x2c] sm:$0xf] %v417
      %450 = vst [vmem:[%s145 + $0x30] sm:$0xf] %v418
      %451 = vst [vmem:[%s145 + $0x34] sm:$0xf] %v419
      %452 = vst [vmem:[%s145 + $0x38] sm:$0xf] %v420
      %453 = vst [vmem:[%s145 + $0x3c] sm:$0xf] %v421
      %s454 = smul.u32 16, %s13
      %p455 = scmp.lt.s32.totalorder %s454, 31
      %s456 = scalar_select %p455, %s454, 31
      %s457 = smul.addr %s456, 4
      %s458 = scalar_lea.vmem %s2, %s457
      // Predicated region
      $region29: #{decoder_forward.6} parent=27 // pred_check
        %p459 = pneg %p78
      $region30: #{decoder_forward.6} parent=27 // pred_check_branch
        %461 = sbr.rel (%p459) target = $region32
      $region31: #{decoder_forward.6} parent=27 // pred_region
        %s462 = smul.u32 16, %s13
      $region32: #{decoder_forward.6} parent=27 // pred_fallthru
        _
    $region28: #{decoder_forward.6} parent=5 // pred_fallthru
      _
    %p463 = scmp.le.s32.totalorder 2, %s8
    // Predicated region
    $region33: #{decoder_forward.6} parent=5 // pred_check
      %p464 = pneg %p463
    $region34: #{decoder_forward.6} parent=5 // pred_check_branch
      %466 = sbr.rel (%p464) target = $region36
    $region35: #{decoder_forward.6} parent=5 // pred_region
      %s467 = ssub.s32 %s8, 2
      // Predicated region
      $region37: #{decoder_forward.6} parent=35 // pred_check
        %p468 = pneg %p84
      $region38: #{decoder_forward.6} parent=35 // pred_check_branch
        %470 = sbr.rel (%p468) target = $region40
      $region39: #{decoder_forward.6} parent=35 // pred_region
        %s471 = smul.u32 16, %s14
        %p472 = scmp.lt.s32.totalorder %s471, 31
        %s473 = scalar_select %p472, %s471, 31
        %s474 = smul.addr %s473, 4
        %s475 = scalar_lea.vmem %s2, %s474
      $region40: #{decoder_forward.6} parent=35 // pred_fallthru
        _
    $region36: #{decoder_forward.6} parent=5 // pred_fallthru
      _
  $region6: #{decoder_forward.6} parent=0 // loop_footer
    %s12 = sadd.s32 1, %s8
  $region7: #{decoder_forward.6} parent=0 // loop_footer_branch
    %7 = sbr.rel target = $region3
  $region8: #{decoder_forward.6} parent=0 // loop_exit
    _

// kernel: decoder_forward.7
$region0: #{decoder_forward.7}
  #allocation0 [shape = 'u32[]', space=smem, size = 0x4, offset = 0x4, fixed_abs, tag = 'smem constant byte address 0x4 - core index']
  #allocation1 [shape = 'u32[144,128]{1,0:T(1,128)}', space=vmem, size = 0x12000, scoped, tag = 'internal scratch']
  %s0 = inlined_call_operand.vmem [shape: bf16[512,64], index: 0, kind: input, shape index: {}]
  %s1 = inlined_call_operand.vmem [shape: bf16[64,128], index: 1, kind: input, shape index: {}]
  %s2 = inlined_call_operand.vmem [shape: bf16[512,128], index: 2, kind: output, shape index: {}]
  %s3 = sld [smem:[#allocation0]]
  $region41: #{decoder_forward.7} parent=0
    _
  %s5 = ssub.s32 1, %s3
  %s6 = scalar_select 0, %s5, %s3
  loop: start=0, step=1, limit=4
  $region2: #{decoder_forward.7} parent=0 // loop_pre_header
    _
  $region3: #{decoder_forward.7} parent=0 // loop_header
    %s8 = sphi 0, %s12
    %p9 = scmp.ge.s32.totalorder %s8, 4
    %s18 = sphi 0, %s20
    %s21 = sphi 0, %s18
    %s22 = sphi 0, %s21
    %s38 = sphi 0, %s22
    %s42 = sphi 0, %s42
    %s44 = sphi 0, %s42
    %s45 = sphi 0, %s44
    %s59 = sphi 0, %s45
    %s65 = sphi 0, %s67
    %s68 = sphi 0, %s65
    %s69 = sphi 0, %s68
    %s85 = sphi 0, %s69
  $region4: #{decoder_forward.7} parent=0 // loop_header_branch
    %11 = sbr.rel (%p9) target = $region8
  $region5: #{decoder_forward.7} parent=0 // loop_body
    %s13 = ssub.s32 %s8, 1
    %s14 = ssub.s32 %s8, 2
    %s15 = sadd.s32 %s8, 1
    %s16 = ssub.s32 %s8, %s15
    %p17 = scmp.eq.s32.totalorder %s16, 0
    %s19 = sadd.s32 %s18, 1
    %s20 = scalar_select %p17, %s18, %s19
    %p23 = pneg %p17
    %p24 = scmp.eq.s32.totalorder %s8, 1
    %p25 = por %p23, %p24
    %p26 = scmp.ne.s32.totalorder %s18, %s21
    %p27 = scmp.eq.s32.totalorder %s8, 0
    %p28 = por %p26, %p27
    %p29 = scmp.ne.s32.totalorder %s18, %s21
    %p30 = scmp.eq.s32.totalorder %s13, 1
    %p31 = por %p29, %p30
    %p32 = scmp.ne.s32.totalorder %s21, %s22
    %p33 = scmp.eq.s32.totalorder %s13, 0
    %p34 = por %p32, %p33
    %p35 = scmp.ne.s32.totalorder %s21, %s22
    %p36 = scmp.eq.s32.totalorder %s14, 1
    %p37 = por %p35, %p36
    %p39 = scmp.ne.s32.totalorder %s22, %s38
    %p40 = scmp.eq.s32.totalorder %s14, 0
    %p41 = por %p39, %p40
    %s43 = sadd.s32 %s42, 1
    %p46 = scmp.eq.s32.totalorder %s8, 1
    %p47 = scmp.ne.s32.totalorder %s42, %s44
    %p48 = scmp.eq.s32.totalorder %s8, 0
    %p49 = por %p47, %p48
    %p50 = scmp.ne.s32.totalorder %s42, %s44
    %p51 = scmp.eq.s32.totalorder %s13, 1
    %p52 = por %p50, %p51
    %p53 = scmp.ne.s32.totalorder %s44, %s45
    %p54 = scmp.eq.s32.totalorder %s13, 0
    %p55 = por %p53, %p54
    %p56 = scmp.ne.s32.totalorder %s44, %s45
    %p57 = scmp.eq.s32.totalorder %s14, 1
    %p58 = por %p56, %p57
    %p60 = scmp.ne.s32.totalorder %s45, %s59
    %p61 = scmp.eq.s32.totalorder %s14, 0
    %p62 = por %p60, %p61
    %s63 = ssub.s32 %s8, %s15
    %p64 = scmp.eq.s32.totalorder %s63, 0
    %s66 = sadd.s32 %s65, 1
    %s67 = scalar_select %p64, %s65, %s66
    %p70 = pneg %p64
    %p71 = scmp.eq.s32.totalorder %s8, 1
    %p72 = por %p70, %p71
    %p73 = scmp.ne.s32.totalorder %s65, %s68
    %p74 = scmp.eq.s32.totalorder %s8, 0
    %p75 = por %p73, %p74
    %p76 = scmp.ne.s32.totalorder %s65, %s68
    %p77 = scmp.eq.s32.totalorder %s13, 1
    %p78 = por %p76, %p77
    %p79 = scmp.ne.s32.totalorder %s68, %s69
    %p80 = scmp.eq.s32.totalorder %s13, 0
    %p81 = por %p79, %p80
    %p82 = scmp.ne.s32.totalorder %s68, %s69
    %p83 = scmp.eq.s32.totalorder %s14, 1
    %p84 = por %p82, %p83
    %p86 = scmp.ne.s32.totalorder %s69, %s85
    %p87 = scmp.eq.s32.totalorder %s14, 0
    %p88 = por %p86, %p87
    %p89 = scmp.le.s32.totalorder 1, %s8
    %p90 = scmp.lt.s32.totalorder %s8, 3
    %p91 = pnand %p89, %p90
    %p92 = pneg %p91
    // Predicated region
    $region9: #{decoder_forward.7} parent=5 // pred_check
      _
    $region10: #{decoder_forward.7} parent=5 // pred_check_branch
      %94 = sbr.rel (%p91) target = $region12
    $region11: #{decoder_forward.7} parent=5 // pred_region
      %s95 = ssub.s32 %s8, 1
      // Predicated region
      $region13: #{decoder_forward.7} parent=11 // pred_check
        %p96 = pneg %p55
      $region14: #{decoder_forward.7} parent=11 // pred_check_branch
        %98 = sbr.rel (%p96) target = $region16
      $region15: #{decoder_forward.7} parent=11 // pred_region
        _
      $region16: #{decoder_forward.7} parent=11 // pred_fallthru
        _
    $region12: #{decoder_forward.7} parent=5 // pred_fallthru
      _
    %p99 = scmp.lt.s32.totalorder %s8, 2
    // Predicated region
    $region17: #{decoder_forward.7} parent=5 // pred_check
      %p100 = pneg %p99
    $region18: #{decoder_forward.7} parent=5 // pred_check_branch
      %102 = sbr.rel (%p100) target = $region20
    $region19: #{decoder_forward.7} parent=5 // pred_region
      // Predicated region
      $region21: #{decoder_forward.7} parent=19 // pred_check
        %p103 = pneg %p28
      $region22: #{decoder_forward.7} parent=19 // pred_check_branch
        %105 = sbr.rel (%p103) target = $region24
      $region23: #{decoder_forward.7} parent=19 // pred_region
        %s106 = smul.u32 32, %s8
        %p107 = scmp.lt.s32.totalorder %s106, 63
        %s108 = scalar_select %p107, %s106, 63
        %s109 = smul.addr %s108, 4
        %s110 = scalar_lea.vmem %s0, %s109
        %s111 = smul.u32 32, %s8
      $region24: #{decoder_forward.7} parent=19 // pred_fallthru
        _
    $region20: #{decoder_forward.7} parent=5 // pred_fallthru
      _
    %p112 = scmp.le.s32.totalorder 1, %s8
    %p113 = scmp.lt.s32.totalorder %s8, 3
    %p114 = pnand %p112, %p113
    %p115 = pneg %p114
    // Predicated region
    $region25: #{decoder_forward.7} parent=5 // pred_check
      _
    $region26: #{decoder_forward.7} parent=5 // pred_check_branch
      %117 = sbr.rel (%p114) target = $region28
    $region27: #{decoder_forward.7} parent=5 // pred_region
      %s118 = ssub.s32 %s8, 1
      %s119 = smul.u32 32, %s13
      %p120 = scmp.lt.s32.totalorder %s119, 63
      %s121 = scalar_select %p120, %s119, 63
      %s122 = smul.addr %s121, 4
      %s123 = scalar_lea.vmem %s0, %s122
      %p124 = pneg %p34
      %p125 = pneg %p31
      %p126 = pneg %p55
      %p127 = pneg %p52
      %p128 = pneg %p81
      %p129 = pneg %p78
      %s130 = smul.u32 32, %s13
      %p131 = scmp.lt.s32.totalorder %s130, 63
      %s132 = scalar_select %p131, %s130, 63
      %s133 = smul.addr %s132, 4
      %s134 = scalar_lea.vmem %s2, %s133
      %s135 = smul.u32 32, %s13
      %p136 = scmp.lt.s32.totalorder %s135, 63
      %s137 = scalar_select %p136, %s135, 63
      %s138 = smul.addr %s137, 4
      %s139 = scalar_lea.vmem %s0, %s138
      %s140 = smul.u32 32, %s13
      %s141 = smul.u32 32, %s13
      %p142 = scmp.lt.s32.totalorder %s141, 63
      %s143 = scalar_select %p142, %s141, 63
      %s144 = smul.addr %s143, 4
      %s145 = scalar_lea.vmem %s2, %s144
      %s146 = smul.u32 32, %s13
      %v148 = vld [vmem:[%s139] sm:$0xf]
      %v149 = vld [vmem:[%s139 + $0x4] sm:$0xf]
      %v150 = vld [vmem:[%s139 + $0x8] sm:$0xf]
      %v151 = vld [vmem:[%s139 + $0xc] sm:$0xf]
      %v152 = vld [vmem:[%s139 + $0x10] sm:$0xf]
      %v153 = vld [vmem:[%s139 + $0x14] sm:$0xf]
      %v154 = vld [vmem:[%s139 + $0x18] sm:$0xf]
      %v155 = vld [vmem:[%s139 + $0x1c] sm:$0xf]
      %v156 = vld [vmem:[%s139 + $0x20] sm:$0xf]
      %v157 = vld [vmem:[%s139 + $0x24] sm:$0xf]
      %v158 = vld [vmem:[%s139 + $0x28] sm:$0xf]
      %v159 = vld [vmem:[%s139 + $0x2c] sm:$0xf]
      %v160 = vld [vmem:[%s139 + $0x30] sm:$0xf]
      %v161 = vld [vmem:[%s139 + $0x34] sm:$0xf]
      %v162 = vld [vmem:[%s139 + $0x38] sm:$0xf]
      %v163 = vld [vmem:[%s139 + $0x3c] sm:$0xf]
      %v164 = vld [vmem:[%s139 + $0x40] sm:$0xf]
      %v165 = vld [vmem:[%s139 + $0x44] sm:$0xf]
      %v166 = vld [vmem:[%s139 + $0x48] sm:$0xf]
      %v167 = vld [vmem:[%s139 + $0x4c] sm:$0xf]
      %v168 = vld [vmem:[%s139 + $0x50] sm:$0xf]
      %v169 = vld [vmem:[%s139 + $0x54] sm:$0xf]
      %v170 = vld [vmem:[%s139 + $0x58] sm:$0xf]
      %v171 = vld [vmem:[%s139 + $0x5c] sm:$0xf]
      %v172 = vld [vmem:[%s139 + $0x60] sm:$0xf]
      %v173 = vld [vmem:[%s139 + $0x64] sm:$0xf]
      %v174 = vld [vmem:[%s139 + $0x68] sm:$0xf]
      %v175 = vld [vmem:[%s139 + $0x6c] sm:$0xf]
      %v176 = vld [vmem:[%s139 + $0x70] sm:$0xf]
      %v177 = vld [vmem:[%s139 + $0x74] sm:$0xf]
      %v178 = vld [vmem:[%s139 + $0x78] sm:$0xf]
      %v179 = vld [vmem:[%s139 + $0x7c] sm:$0xf]
      %v180 = vld [vmem:[%s1] sm:$0xf]
      %v181 = vld [vmem:[%s1 + $0x4] sm:$0xf]
      %v182 = vld [vmem:[%s1 + $0x8] sm:$0xf]
      %v183 = vld [vmem:[%s1 + $0xc] sm:$0xf]
      %v184 = vld [vmem:[%s1 + $0x10] sm:$0xf]
      %v185 = vld [vmem:[%s1 + $0x14] sm:$0xf]
      %v186 = vld [vmem:[%s1 + $0x18] sm:$0xf]
      %v187 = vld [vmem:[%s1 + $0x1c] sm:$0xf]
      %v220 = vunpack.c.l.b16 %v148
      %v221 = vunpack.c.l.b16 %v149
      %v222 = vunpack.c.l.b16 %v150
      %v223 = vunpack.c.l.b16 %v151
      %v224 = vunpack.c.l.b16 %v152
      %v225 = vunpack.c.l.b16 %v153
      %v226 = vunpack.c.l.b16 %v154
      %v227 = vunpack.c.l.b16 %v155
      %v228 = vunpack.c.l.b16 %v156
      %v229 = vunpack.c.l.b16 %v157
      %v230 = vunpack.c.l.b16 %v158
      %v231 = vunpack.c.l.b16 %v159
      %v232 = vunpack.c.l.b16 %v160
      %v233 = vunpack.c.l.b16 %v161
      %v234 = vunpack.c.l.b16 %v162
      %v235 = vunpack.c.l.b16 %v163
      %v236 = vunpack.c.l.b16 %v164
      %v237 = vunpack.c.l.b16 %v165
      %v238 = vunpack.c.l.b16 %v166
      %v239 = vunpack.c.l.b16 %v167
      %v240 = vunpack.c.l.b16 %v168
      %v241 = vunpack.c.l.b16 %v169
      %v242 = vunpack.c.l.b16 %v170
      %v243 = vunpack.c.l.b16 %v171
      %v244 = vunpack.c.l.b16 %v172
      %v245 = vunpack.c.l.b16 %v173
      %v246 = vunpack.c.l.b16 %v174
      %v247 = vunpack.c.l.b16 %v175
      %v248 = vunpack.c.l.b16 %v176
      %v249 = vunpack.c.l.b16 %v177
      %v250 = vunpack.c.l.b16 %v178
      %v251 = vunpack.c.l.b16 %v179
      %v252 = vpack.c.b16 %v221, %v220
      %v253 = vpack.c.b16 %v223, %v222
      %v254 = vpack.c.b16 %v225, %v224
      %v255 = vpack.c.b16 %v227, %v226
      %v256 = vpack.c.b16 %v229, %v228
      %v257 = vpack.c.b16 %v231, %v230
      %v258 = vpack.c.b16 %v233, %v232
      %v259 = vpack.c.b16 %v235, %v234
      %v260 = vpack.c.b16 %v237, %v236
      %v261 = vpack.c.b16 %v239, %v238
      %v262 = vpack.c.b16 %v241, %v240
      %v263 = vpack.c.b16 %v243, %v242
      %v264 = vpack.c.b16 %v245, %v244
      %v265 = vpack.c.b16 %v247, %v246
      %v266 = vpack.c.b16 %v249, %v248
      %v267 = vpack.c.b16 %v251, %v250
      %v276 = vunpack.c.l.b16 %v180
      %v277 = vunpack.c.l.b16 %v181
      %v278 = vunpack.c.l.b16 %v182
      %v279 = vunpack.c.l.b16 %v183
      %v280 = vunpack.c.l.b16 %v184
      %v281 = vunpack.c.l.b16 %v185
      %v282 = vunpack.c.l.b16 %v186
      %v283 = vunpack.c.l.b16 %v187
      %v284 = vpack.c.b16 %v277, %v276
      %v285 = vpack.c.b16 %v279, %v278
      %v286 = vpack.c.b16 %v281, %v280
      %v287 = vpack.c.b16 %v283, %v282
      %vm292 = vcmask 523264
      %v294 = vsel %vm292, %v252, 0
      %v297 = vsel %vm292, %v253, 0
      %v300 = vsel %vm292, %v254, 0
      %v303 = vsel %vm292, %v255, 0
      %v306 = vsel %vm292, %v256, 0
      %v309 = vsel %vm292, %v257, 0
      %v312 = vsel %vm292, %v258, 0
      %v315 = vsel %vm292, %v259, 0
      %v318 = vsel %vm292, %v260, 0
      %v321 = vsel %vm292, %v261, 0
      %v324 = vsel %vm292, %v262, 0
      %v327 = vsel %vm292, %v263, 0
      %v330 = vsel %vm292, %v264, 0
      %v333 = vsel %vm292, %v265, 0
      %v336 = vsel %vm292, %v266, 0
      %v339 = vsel %vm292, %v267, 0
      %341 = vmatprep.subr.bf16.mxu0 0
      %342 = vmatpush1.bf16.msra.mxu0 0
      %343 = vmatprep.subr.bf16.mxu0 0
      %344 = vmatpush1.bf16.msra.mxu0 0
      %345 = vmatprep.subr.bf16.mxu0 0
      %346 = vmatpush1.bf16.msra.mxu0 0
      %347 = vmatprep.subr.bf16.mxu0 0
      %348 = vmatpush1.bf16.msra.mxu0 0
      %349 = vmatprep.subr.bf16.mxu0 0
      %350 = vmatpush1.bf16.msra.mxu0 %v287
      %351 = vmatprep.subr.bf16.mxu0 0
      %352 = vmatpush1.bf16.msra.mxu0 %v286
      %353 = vmatprep.subr.bf16.mxu0 0
      %354 = vmatpush1.bf16.msra.mxu0 %v285
      %355 = vmatprep.subr.bf16.mxu0 0
      %356 = vmatpush1.bf16.msra.mxu0 %v284
      %357 = vmatprep.subr.bf16.mxu0 0
      %358 = vmatpush2.bf16.msra.mxu0 0
      %359 = vmatprep.subr.bf16.mxu0 0
      %360 = vmatpush2.bf16.msra.mxu0 0
      %361 = vmatprep.subr.bf16.mxu0 0
      %362 = vmatpush2.bf16.msra.mxu0 0
      %363 = vmatprep.subr.bf16.mxu0 0
      %364 = vmatpush2.bf16.msra.mxu0 0
      %365 = vmatprep.subr.bf16.mxu0 0
      %366 = vmatpush2.bf16.msra.mxu0 0
      %367 = vmatprep.subr.bf16.mxu0 0
      %368 = vmatpush2.bf16.msra.mxu0 0
      %369 = vmatprep.subr.bf16.mxu0 0
      %370 = vmatpush2.bf16.msra.mxu0 0
      %371 = vmatprep.subr.bf16.mxu0 0
      %372 = vmatpush2.bf16.msra.mxu0 0
      %373 = vmatprep.mubr.bf16.mxu0 0
      %374 = vmatmul.mubr.bf16.gmra.mxu0 %v294
      %v375 = vpop.f32.mrf.mxu0
      %v376 = vadd.f32 0.0, %v375
      %v377 = vpop.f32.mrf.mxu0
      %v378 = vpop.f32.mrf.mxu0
      %v379 = vadd.f32 0.0, %v378
      %v380 = vpop.f32.mrf.mxu0
      %381 = vmatprep.mubr.bf16.mxu0 0
      %382 = vmatmul.mubr.bf16.gmra.mxu0 %v297
      %v383 = vpop.f32.mrf.mxu0
      %v384 = vadd.f32 0.0, %v383
      %v385 = vpop.f32.mrf.mxu0
      %v386 = vpop.f32.mrf.mxu0
      %v387 = vadd.f32 0.0, %v386
      %v388 = vpop.f32.mrf.mxu0
      %389 = vmatprep.mubr.bf16.mxu0 0
      %390 = vmatmul.mubr.bf16.gmra.mxu0 %v300
      %v391 = vpop.f32.mrf.mxu0
      %v392 = vadd.f32 0.0, %v391
      %v393 = vpop.f32.mrf.mxu0
      %v394 = vpop.f32.mrf.mxu0
      %v395 = vadd.f32 0.0, %v394
      %v396 = vpop.f32.mrf.mxu0
      %397 = vmatprep.mubr.bf16.mxu0 0
      %398 = vmatmul.mubr.bf16.gmra.mxu0 %v303
      %v399 = vpop.f32.mrf.mxu0
      %v400 = vadd.f32 0.0, %v399
      %v401 = vpop.f32.mrf.mxu0
      %v402 = vpop.f32.mrf.mxu0
      %v403 = vadd.f32 0.0, %v402
      %v404 = vpop.f32.mrf.mxu0
      %405 = vmatprep.mubr.bf16.mxu0 0
      %406 = vmatmul.mubr.bf16.gmra.mxu0 %v306
      %v407 = vpop.f32.mrf.mxu0
      %v408 = vadd.f32 0.0, %v407
      %v409 = vpop.f32.mrf.mxu0
      %v410 = vpop.f32.mrf.mxu0
      %v411 = vadd.f32 0.0, %v410
      %v412 = vpop.f32.mrf.mxu0
      %413 = vmatprep.mubr.bf16.mxu0 0
      %414 = vmatmul.mubr.bf16.gmra.mxu0 %v309
      %v415 = vpop.f32.mrf.mxu0
      %v416 = vadd.f32 0.0, %v415
      %v417 = vpop.f32.mrf.mxu0
      %v418 = vpop.f32.mrf.mxu0
      %v419 = vadd.f32 0.0, %v418
      %v420 = vpop.f32.mrf.mxu0
      %421 = vmatprep.mubr.bf16.mxu0 0
      %422 = vmatmul.mubr.bf16.gmra.mxu0 %v312
      %v423 = vpop.f32.mrf.mxu0
      %v424 = vadd.f32 0.0, %v423
      %v425 = vpop.f32.mrf.mxu0
      %v426 = vpop.f32.mrf.mxu0
      %v427 = vadd.f32 0.0, %v426
      %v428 = vpop.f32.mrf.mxu0
      %429 = vmatprep.mubr.bf16.mxu0 0
      %430 = vmatmul.mubr.bf16.gmra.mxu0 %v315
      %v431 = vpop.f32.mrf.mxu0
      %v432 = vadd.f32 0.0, %v431
      %v433 = vpop.f32.mrf.mxu0
      %v434 = vpop.f32.mrf.mxu0
      %v435 = vadd.f32 0.0, %v434
      %v436 = vpop.f32.mrf.mxu0
      %437 = vmatprep.mubr.bf16.mxu0 0
      %438 = vmatmul.mubr.bf16.gmra.mxu0 %v318
      %v439 = vpop.f32.mrf.mxu0
      %v440 = vadd.f32 0.0, %v439
      %v441 = vpop.f32.mrf.mxu0
      %v442 = vpop.f32.mrf.mxu0
      %v443 = vadd.f32 0.0, %v442
      %v444 = vpop.f32.mrf.mxu0
      %445 = vmatprep.mubr.bf16.mxu0 0
      %446 = vmatmul.mubr.bf16.gmra.mxu0 %v321
      %v447 = vpop.f32.mrf.mxu0
      %v448 = vadd.f32 0.0, %v447
      %v449 = vpop.f32.mrf.mxu0
      %v450 = vpop.f32.mrf.mxu0
      %v451 = vadd.f32 0.0, %v450
      %v452 = vpop.f32.mrf.mxu0
      %453 = vmatprep.mubr.bf16.mxu0 0
      %454 = vmatmul.mubr.bf16.gmra.mxu0 %v324
      %v455 = vpop.f32.mrf.mxu0
      %v456 = vadd.f32 0.0, %v455
      %v457 = vpop.f32.mrf.mxu0
      %v458 = vpop.f32.mrf.mxu0
      %v459 = vadd.f32 0.0, %v458
      %v460 = vpop.f32.mrf.mxu0
      %461 = vmatprep.mubr.bf16.mxu0 0
      %462 = vmatmul.mubr.bf16.gmra.mxu0 %v327
      %v463 = vpop.f32.mrf.mxu0
      %v464 = vadd.f32 0.0, %v463
      %v465 = vpop.f32.mrf.mxu0
      %v466 = vpop.f32.mrf.mxu0
      %v467 = vadd.f32 0.0, %v466
      %v468 = vpop.f32.mrf.mxu0
      %469 = vmatprep.mubr.bf16.mxu0 0
      %470 = vmatmul.mubr.bf16.gmra.mxu0 %v330
      %v471 = vpop.f32.mrf.mxu0
      %v472 = vadd.f32 0.0, %v471
      %v473 = vpop.f32.mrf.mxu0
      %v474 = vpop.f32.mrf.mxu0
      %v475 = vadd.f32 0.0, %v474
      %v476 = vpop.f32.mrf.mxu0
      %477 = vmatprep.mubr.bf16.mxu0 0
      %478 = vmatmul.mubr.bf16.gmra.mxu0 %v333
      %v479 = vpop.f32.mrf.mxu0
      %v480 = vadd.f32 0.0, %v479
      %v481 = vpop.f32.mrf.mxu0
      %v482 = vpop.f32.mrf.mxu0
      %v483 = vadd.f32 0.0, %v482
      %v484 = vpop.f32.mrf.mxu0
      %485 = vmatprep.mubr.bf16.mxu0 0
      %486 = vmatmul.mubr.bf16.gmra.mxu0 %v336
      %v487 = vpop.f32.mrf.mxu0
      %v488 = vadd.f32 0.0, %v487
      %v489 = vpop.f32.mrf.mxu0
      %v490 = vpop.f32.mrf.mxu0
      %v491 = vadd.f32 0.0, %v490
      %v492 = vpop.f32.mrf.mxu0
      %493 = vmatprep.mubr.bf16.mxu0 0
      %494 = vmatmul.mubr.bf16.gmra.mxu0 %v339
      %v495 = vpop.f32.mrf.mxu0
      %v496 = vadd.f32 0.0, %v495
      %v497 = vpop.f32.mrf.mxu0
      %v498 = vpop.f32.mrf.mxu0
      %v499 = vadd.f32 0.0, %v498
      %v500 = vpop.f32.mrf.mxu0
      %501 = vdwg.mxu0
      %v502 = vmax.f32 %v376, 0.0
      %v503 = vmax.f32 %v379, 0.0
      %v504 = vmax.f32 %v384, 0.0
      %v505 = vmax.f32 %v387, 0.0
      %v506 = vmax.f32 %v392, 0.0
      %v507 = vmax.f32 %v395, 0.0
      %v508 = vmax.f32 %v400, 0.0
      %v509 = vmax.f32 %v403, 0.0
      %v510 = vmax.f32 %v408, 0.0
      %v511 = vmax.f32 %v411, 0.0
      %v512 = vmax.f32 %v416, 0.0
      %v513 = vmax.f32 %v419, 0.0
      %v514 = vmax.f32 %v424, 0.0
      %v515 = vmax.f32 %v427, 0.0
      %v516 = vmax.f32 %v432, 0.0
      %v517 = vmax.f32 %v435, 0.0
      %v518 = vmax.f32 %v440, 0.0
      %v519 = vmax.f32 %v443, 0.0
      %v520 = vmax.f32 %v448, 0.0
      %v521 = vmax.f32 %v451, 0.0
      %v522 = vmax.f32 %v456, 0.0
      %v523 = vmax.f32 %v459, 0.0
      %v524 = vmax.f32 %v464, 0.0
      %v525 = vmax.f32 %v467, 0.0
      %v526 = vmax.f32 %v472, 0.0
      %v527 = vmax.f32 %v475, 0.0
      %v528 = vmax.f32 %v480, 0.0
      %v529 = vmax.f32 %v483, 0.0
      %v530 = vmax.f32 %v488, 0.0
      %v531 = vmax.f32 %v491, 0.0
      %v532 = vmax.f32 %v496, 0.0
      %v533 = vmax.f32 %v499, 0.0
      %v534 = vpack.c.bf16 %v503, %v502
      %v535 = vpack.c.bf16 %v505, %v504
      %v536 = vpack.c.bf16 %v507, %v506
      %v537 = vpack.c.bf16 %v509, %v508
      %v538 = vpack.c.bf16 %v511, %v510
      %v539 = vpack.c.bf16 %v513, %v512
      %v540 = vpack.c.bf16 %v515, %v514
      %v541 = vpack.c.bf16 %v517, %v516
      %v542 = vpack.c.bf16 %v519, %v518
      %v543 = vpack.c.bf16 %v521, %v520
      %v544 = vpack.c.bf16 %v523, %v522
      %v545 = vpack.c.bf16 %v525, %v524
      %v546 = vpack.c.bf16 %v527, %v526
      %v547 = vpack.c.bf16 %v529, %v528
      %v548 = vpack.c.bf16 %v531, %v530
      %v549 = vpack.c.bf16 %v533, %v532
      %v566 = vunpack.c.l.b16 %v534
      %v567 = vunpack.c.h.b16 %v534
      %v568 = vunpack.c.l.b16 %v535
      %v569 = vunpack.c.h.b16 %v535
      %v570 = vunpack.c.l.b16 %v536
      %v571 = vunpack.c.h.b16 %v536
      %v572 = vunpack.c.l.b16 %v537
      %v573 = vunpack.c.h.b16 %v537
      %v574 = vunpack.c.l.b16 %v538
      %v575 = vunpack.c.h.b16 %v538
      %v576 = vunpack.c.l.b16 %v539
      %v577 = vunpack.c.h.b16 %v539
      %v578 = vunpack.c.l.b16 %v540
      %v579 = vunpack.c.h.b16 %v540
      %v580 = vunpack.c.l.b16 %v541
      %v581 = vunpack.c.h.b16 %v541
      %v582 = vunpack.c.l.b16 %v542
      %v583 = vunpack.c.h.b16 %v542
      %v584 = vunpack.c.l.b16 %v543
      %v585 = vunpack.c.h.b16 %v543
      %v586 = vunpack.c.l.b16 %v544
      %v587 = vunpack.c.h.b16 %v544
      %v588 = vunpack.c.l.b16 %v545
      %v589 = vunpack.c.h.b16 %v545
      %v590 = vunpack.c.l.b16 %v546
      %v591 = vunpack.c.h.b16 %v546
      %v592 = vunpack.c.l.b16 %v547
      %v593 = vunpack.c.h.b16 %v547
      %v594 = vunpack.c.l.b16 %v548
      %v595 = vunpack.c.h.b16 %v548
      %v596 = vunpack.c.l.b16 %v549
      %v597 = vunpack.c.h.b16 %v549
      %v598 = vpack.c.b16 %v566, %v566
      %v599 = vpack.c.b16 %v567, %v567
      %v600 = vpack.c.b16 %v568, %v568
      %v601 = vpack.c.b16 %v569, %v569
      %v602 = vpack.c.b16 %v570, %v570
      %v603 = vpack.c.b16 %v571, %v571
      %v604 = vpack.c.b16 %v572, %v572
      %v605 = vpack.c.b16 %v573, %v573
      %v606 = vpack.c.b16 %v574, %v574
      %v607 = vpack.c.b16 %v575, %v575
      %v608 = vpack.c.b16 %v576, %v576
      %v609 = vpack.c.b16 %v577, %v577
      %v610 = vpack.c.b16 %v578, %v578
      %v611 = vpack.c.b16 %v579, %v579
      %v612 = vpack.c.b16 %v580, %v580
      %v613 = vpack.c.b16 %v581, %v581
      %v614 = vpack.c.b16 %v582, %v582
      %v615 = vpack.c.b16 %v583, %v583
      %v616 = vpack.c.b16 %v584, %v584
      %v617 = vpack.c.b16 %v585, %v585
      %v618 = vpack.c.b16 %v586, %v586
      %v619 = vpack.c.b16 %v587, %v587
      %v620 = vpack.c.b16 %v588, %v588
      %v621 = vpack.c.b16 %v589, %v589
      %v622 = vpack.c.b16 %v590, %v590
      %v623 = vpack.c.b16 %v591, %v591
      %v624 = vpack.c.b16 %v592, %v592
      %v625 = vpack.c.b16 %v593, %v593
      %v626 = vpack.c.b16 %v594, %v594
      %v627 = vpack.c.b16 %v595, %v595
      %v628 = vpack.c.b16 %v596, %v596
      %v629 = vpack.c.b16 %v597, %v597
      %662 = vst [vmem:[%s145] sm:$0xf] %v598
      %663 = vst [vmem:[%s145 + $0x4] sm:$0xf] %v599
      %664 = vst [vmem:[%s145 + $0x8] sm:$0xf] %v600
      %665 = vst [vmem:[%s145 + $0xc] sm:$0xf] %v601
      %666 = vst [vmem:[%s145 + $0x10] sm:$0xf] %v602
      %667 = vst [vmem:[%s145 + $0x14] sm:$0xf] %v603
      %668 = vst [vmem:[%s145 + $0x18] sm:$0xf] %v604
      %669 = vst [vmem:[%s145 + $0x1c] sm:$0xf] %v605
      %670 = vst [vmem:[%s145 + $0x20] sm:$0xf] %v606
      %671 = vst [vmem:[%s145 + $0x24] sm:$0xf] %v607
      %672 = vst [vmem:[%s145 + $0x28] sm:$0xf] %v608
      %673 = vst [vmem:[%s145 + $0x2c] sm:$0xf] %v609
      %674 = vst [vmem:[%s145 + $0x30] sm:$0xf] %v610
      %675 = vst [vmem:[%s145 + $0x34] sm:$0xf] %v611
      %676 = vst [vmem:[%s145 + $0x38] sm:$0xf] %v612
      %677 = vst [vmem:[%s145 + $0x3c] sm:$0xf] %v613
      %678 = vst [vmem:[%s145 + $0x40] sm:$0xf] %v614
      %679 = vst [vmem:[%s145 + $0x44] sm:$0xf] %v615
      %680 = vst [vmem:[%s145 + $0x48] sm:$0xf] %v616
      %681 = vst [vmem:[%s145 + $0x4c] sm:$0xf] %v617
      %682 = vst [vmem:[%s145 + $0x50] sm:$0xf] %v618
      %683 = vst [vmem:[%s145 + $0x54] sm:$0xf] %v619
      %684 = vst [vmem:[%s145 + $0x58] sm:$0xf] %v620
      %685 = vst [vmem:[%s145 + $0x5c] sm:$0xf] %v621
      %686 = vst [vmem:[%s145 + $0x60] sm:$0xf] %v622
      %687 = vst [vmem:[%s145 + $0x64] sm:$0xf] %v623
      %688 = vst [vmem:[%s145 + $0x68] sm:$0xf] %v624
      %689 = vst [vmem:[%s145 + $0x6c] sm:$0xf] %v625
      %690 = vst [vmem:[%s145 + $0x70] sm:$0xf] %v626
      %691 = vst [vmem:[%s145 + $0x74] sm:$0xf] %v627
      %692 = vst [vmem:[%s145 + $0x78] sm:$0xf] %v628
      %693 = vst [vmem:[%s145 + $0x7c] sm:$0xf] %v629
      %s694 = smul.u32 32, %s13
      %p695 = scmp.lt.s32.totalorder %s694, 63
      %s696 = scalar_select %p695, %s694, 63
      %s697 = smul.addr %s696, 4
      %s698 = scalar_lea.vmem %s2, %s697
      // Predicated region
      $region29: #{decoder_forward.7} parent=27 // pred_check
        %p699 = pneg %p78
      $region30: #{decoder_forward.7} parent=27 // pred_check_branch
        %701 = sbr.rel (%p699) target = $region32
      $region31: #{decoder_forward.7} parent=27 // pred_region
        %s702 = smul.u32 32, %s13
      $region32: #{decoder_forward.7} parent=27 // pred_fallthru
        _
    $region28: #{decoder_forward.7} parent=5 // pred_fallthru
      _
    %p703 = scmp.le.s32.totalorder 2, %s8
    // Predicated region
    $region33: #{decoder_forward.7} parent=5 // pred_check
      %p704 = pneg %p703
    $region34: #{decoder_forward.7} parent=5 // pred_check_branch
      %706 = sbr.rel (%p704) target = $region36
    $region35: #{decoder_forward.7} parent=5 // pred_region
      %s707 = ssub.s32 %s8, 2
      // Predicated region
      $region37: #{decoder_forward.7} parent=35 // pred_check
        %p708 = pneg %p84
      $region38: #{decoder_forward.7} parent=35 // pred_check_branch
        %710 = sbr.rel (%p708) target = $region40
      $region39: #{decoder_forward.7} parent=35 // pred_region
        %s711 = smul.u32 32, %s14
        %p712 = scmp.lt.s32.totalorder %s711, 63
        %s713 = scalar_select %p712, %s711, 63
        %s714 = smul.addr %s713, 4
        %s715 = scalar_lea.vmem %s2, %s714
      $region40: #{decoder_forward.7} parent=35 // pred_fallthru
        _
    $region36: #{decoder_forward.7} parent=5 // pred_fallthru
      _
  $region6: #{decoder_forward.7} parent=0 // loop_footer
    %s12 = sadd.s32 1, %s8
  $region7: #{decoder_forward.7} parent=0 // loop_footer_branch
    %7 = sbr.rel target = $region3
  $region8: #{decoder_forward.7} parent=0 // loop_exit
    _

</llo_original>
